<compile_context>
chip_gen: v5e
topology: v5e:2x2
jax: 0.10.0
libtpu: 0.0.40
codegen_flags: <defaults>
</compile_context>

<pallas_src>
import inspect

import jax
import jax.numpy as jnp
from jax.experimental import pallas as pl
from jax.experimental.pallas import tpu as pltpu

LN_EPS = 1e-5          # torch.nn.LayerNorm default eps
SMOOTH_L1_BETA = 2.0   # nn.SmoothL1Loss(beta=2.0)

IMAGENET_MEAN = jnp.array([0.485, 0.456, 0.406], jnp.float32)
IMAGENET_STD = jnp.array([0.229, 0.224, 0.225], jnp.float32)
CLIP_MEAN = jnp.array([0.48145466, 0.4578275, 0.40821073], jnp.float32)
CLIP_STD = jnp.array([0.26862954, 0.26130258, 0.27577711], jnp.float32)


def _round_up(x, m):
    return ((x + m - 1) // m) * m


def _supports_pipeline_mode():
    """True if this JAX exposes BlockSpec(pipeline_mode=...) and pl.Buffered."""
    try:
        return (hasattr(pl, "Buffered")
                and "pipeline_mode" in inspect.signature(pl.BlockSpec).parameters)
    except (TypeError, ValueError):
        return False


# ---------------------------------------------------------------------------
# Pallas kernel: fused decoder matmul + target LayerNorm + SmoothL1 partial sums
# ---------------------------------------------------------------------------
def _make_fd_loss_kernel(n_valid, tile_n, needs_mask):
    def kernel(z_ref, wt_ref, b_ref, tgt_ref, out_ref):
        z = z_ref[...]                            # (tile_n, C)  bf16
        wt = wt_ref[...]                          # (C, E)       bf16 (pre-transposed, resident)
        bias = b_ref[...]                         # (1, E)       f32  (resident)
        tgt = tgt_ref[...].astype(jnp.float32)    # (tile_n, E)  f32 for LN / loss math

        # decoder: Conv1d(in=C, out=E, kernel_size=1) == z @ W^T + b  (bf16 MXU, f32 acc)
        x_rec = jnp.dot(z, wt, preferred_element_type=jnp.float32) + bias

        # ln_tgt: LayerNorm(E, elementwise_affine=False) over the last axis
        mu = jnp.mean(tgt, axis=-1, keepdims=True)
        ctr = tgt - mu
        var = jnp.mean(ctr * ctr, axis=-1, keepdims=True)
        tgt_ln = ctr * jax.lax.rsqrt(var + LN_EPS)

        # SmoothL1Loss(beta=2.0) elementwise term (f32)
        d = x_rec - tgt_ln
        ad = jnp.abs(d)
        elem = jnp.where(
            ad < SMOOTH_L1_BETA,
            (0.5 / SMOOTH_L1_BETA) * d * d,
            ad - 0.5 * SMOOTH_L1_BETA,
        )

        def _store(vals):
            # Per-tile partial sum, broadcast over a lane-dense (1, 8, 128) output block.
            out_ref[...] = jnp.broadcast_to(jnp.sum(vals), out_ref.shape)

        if needs_mask:
            step = pl.program_id(0)
            last = pl.num_programs(0) - 1

            # Only the final (partial) tile pays the iota/compare/select masking cost.
            @pl.when(step != last)
            def _():
                _store(elem)

            @pl.when(step == last)
            def _():
                row = step * tile_n + jax.lax.broadcasted_iota(jnp.int32, elem.shape, 0)
                _store(jnp.where(row < n_valid, elem, 0.0))
        else:
            _store(elem)

    return kernel


def fd_loss(z, w_dec, b_dec, x_tgt, *, tile_n=1024):
    """z: (N, C), w_dec: (E, C), b_dec: (E,) or (1, E), x_tgt: (N, E) -> scalar loss.

    tile_n: token-tile size (rounded to a multiple of 16 for bf16 sublane packing and
    clamped to N).  At real FD sizes (C~1024, E~768) tile_n=1024 needs roughly 20-25 MiB
    of VMEM including f32 temporaries; the scoped-VMEM limit is raised explicitly below
    because the v5e *scoped* default is only 16 MiB (128 MiB is physical) and v7x has
    64 MiB physical per TensorCore.
    """
    N, C = z.shape
    E = w_dec.shape[0]
    assert w_dec.shape == (E, C) and x_tgt.shape == (N, E)

    # bf16 for the two big streams and the weight (halves HBM traffic, native MXU path);
    # bias stays f32 (tiny, resident).  Pre-transpose the Conv1d weight once on the host.
    # (If z / x_tgt are already bf16 these casts are no-ops; XLA fuses them otherwise.)
    z_b = z.astype(jnp.bfloat16)
    tgt_b = x_tgt.astype(jnp.bfloat16)
    wt_b = jnp.transpose(w_dec).astype(jnp.bfloat16)          # (C, E)
    b = jnp.reshape(b_dec, (1, E)).astype(jnp.float32)

    # Tile sizing: multiple of 16 (bf16 sublane packing), clamped to N.  No host-side pad:
    # the last (possibly partial) block is masked inside the kernel.
    tile_n = max(16, min(int(tile_n), _round_up(N, 16)))
    tile_n = _round_up(tile_n, 16)
    num_tiles = pl.cdiv(N, tile_n)
    needs_mask = (N % tile_n) != 0

    kernel = _make_fd_loss_kernel(N, tile_n, needs_mask)

    # Explicit scoped-VMEM limit: double-buffered bf16 streams + resident weight/bias +
    # partial-sum blocks + f32 temporaries, with 2x headroom, clamped to [32, 56] MiB.
    block_bytes = (2 * tile_n * C * 2          # z tiles (2 buffers, bf16)
                   + 2 * tile_n * E * 2        # x_tgt tiles (2 buffers, bf16)
                   + 2 * C * E * 2             # W^T (<=2 buffers, bf16)
                   + 2 * E * 4                 # bias
                   + 2 * 8 * 128 * 4)          # per-tile partial-sum blocks
    temp_bytes = 4 * tile_n * E * 4            # f32 temporaries (tgt, x_rec, diff, elem)
    vmem_limit = int(min(max(2 * (block_bytes + temp_bytes), 32 << 20), 56 << 20))

    cost = pl.CostEstimate(
        flops=2 * N * C * E + 12 * N * E,
        transcendentals=N,                                     # one rsqrt per token
        bytes_accessed=N * (C + E) * 2 + C * E * 2 + E * 4 + num_tiles * 8 * 128 * 4,
    )

    def build(single_buffer_resident):
        if single_buffer_resident:
            # Resident operands have constant index maps; single-buffer them to save VMEM.
            wt_spec = pl.BlockSpec((C, E), lambda i: (0, 0), pipeline_mode=pl.Buffered(1))
            b_spec = pl.BlockSpec((1, E), lambda i: (0, 0), pipeline_mode=pl.Buffered(1))
        else:
            wt_spec = pl.BlockSpec((C, E), lambda i: (0, 0))
            b_spec = pl.BlockSpec((1, E), lambda i: (0, 0))
        return pl.pallas_call(
            kernel,
            out_shape=jax.ShapeDtypeStruct((num_tiles, 8, 128), jnp.float32),
            grid_spec=pltpu.PrefetchScalarGridSpec(
                num_scalar_prefetch=0,
                grid=(num_tiles,),
                in_specs=[
                    pl.BlockSpec((tile_n, C), lambda i: (i, 0)),   # z tile (pipelined)
                    wt_spec,                                        # W^T, VMEM-resident
                    b_spec,                                         # bias, VMEM-resident
                    pl.BlockSpec((tile_n, E), lambda i: (i, 0)),   # x_tgt tile (pipelined)
                ],
                out_specs=pl.BlockSpec((1, 8, 128), lambda i: (i, 0, 0)),
            ),
            compiler_params=pltpu.CompilerParams(
                # Per-tile partials make the token-tile axis embarrassingly parallel, so it
                # can be split across both v7x TensorCores (correct accumulator-per-tile).
                dimension_semantics=("parallel",),
                vmem_limit_bytes=vmem_limit,
            ),
            cost_estimate=cost,
        )

    use_single = _supports_pipeline_mode()
    try:
        parts = build(use_single)(z_b, wt_b, b, tgt_b)
    except Exception:
        if not use_single:
            raise
        # Fallback if this JAX/Mosaic build rejects single-buffered resident blocks.
        parts = build(False)(z_b, wt_b, b, tgt_b)

    # Final reduction over per-tile partials + mean scaling in plain JAX (cheap, scalar).
    return jnp.sum(parts[:, 0, 0]) * (1.0 / float(N * E))


# ---------------------------------------------------------------------------
# Plain-JAX glue: deterministic stand-ins for the external frozen backbones
# ---------------------------------------------------------------------------
def extract_patches(x_nchw, patch_size):
    """NCHW image -> (B, L, in_chans*patch*patch) token patches."""
    B, Cin, H, W = x_nchw.shape
    p = patch_size
    x = x_nchw.reshape(B, Cin, H // p, p, W // p, p)
    x = x.transpose(0, 2, 4, 1, 3, 5)                 # (B, H/p, W/p, Cin, p, p)
    return x.reshape(B, (H // p) * (W // p), Cin * p * p)


def encoder_stub(x_nchw, w_enc, b_enc, patch_size):
    """Stand-in encoder: patch-embedding linear projection -> (B, L, C) in bf16.

    The bf16 cast is fused into the producing matmul (no extra HBM pass for the kernel).
    """
    patches = extract_patches(x_nchw, patch_size)
    return (patches @ w_enc.T + b_enc).astype(jnp.bfloat16)


def teacher_stub(x_nchw, w_t, b_t, patch_size):
    """Stand-in frozen feature model (CLIP-like): re-normalize image, patch-embed (bf16)."""
    im_m = IMAGENET_MEAN.reshape(1, 3, 1, 1)
    im_s = IMAGENET_STD.reshape(1, 3, 1, 1)
    cl_m = CLIP_MEAN.reshape(1, 3, 1, 1)
    cl_s = CLIP_STD.reshape(1, 3, 1, 1)
    x = x_nchw * im_s + im_m                    # unnormalize (ImageNet)
    x = (x - cl_m) / cl_s                       # normalize_clip
    patches = extract_patches(x, patch_size)
    # Note: streaming the teacher features as bf16 means the LayerNorm statistics are
    # computed on bf16-rounded targets (slight deviation from torch's fp32 LN).
    return (patches @ w_t.T + b_t).astype(jnp.bfloat16)


def fd_forward(x_nchw, params, patch_size, *, tile_n=1024):
    """Full FD.forward: returns {'loss': scalar}."""
    z = encoder_stub(x_nchw, params["w_enc"], params["b_enc"], patch_size)       # (B, L, C)
    x_tgt = teacher_stub(x_nchw, params["w_tch"], params["b_tch"], patch_size)   # (B, L, E)

    B, L, C = z.shape
    E = x_tgt.shape[-1]
    loss = fd_loss(
        z.reshape(B * L, C),
        params["w_dec"],
        params["b_dec"],
        x_tgt.reshape(B * L, E),
        tile_n=tile_n,
    )
    return {"loss": loss}


# ---------------------------------------------------------------------------
# Pure-JAX reference (for a correctness sanity check)
# ---------------------------------------------------------------------------
def fd_loss_ref(z, w_dec, b_dec, x_tgt):
    x_rec = z @ w_dec.T + b_dec
    mu = jnp.mean(x_tgt, axis=-1, keepdims=True)
    var = jnp.mean((x_tgt - mu) ** 2, axis=-1, keepdims=True)
    tgt_ln = (x_tgt - mu) / jnp.sqrt(var + LN_EPS)
    d = x_rec - tgt_ln
    ad = jnp.abs(d)
    elem = jnp.where(ad < SMOOTH_L1_BETA, 0.5 * d * d / SMOOTH_L1_BETA,
                     ad - 0.5 * SMOOTH_L1_BETA)
    return jnp.mean(elem)


if __name__ == "__main__":
    # Small, forward-consistent shapes:
    B, in_chans, img, patch = 2, 3, 32, 4
    L = (img // patch) ** 2          # 64 tokens per image
    N = B * L                        # 128 tokens total
    C = 128                          # encoder.num_features (lane-dense)
    E = 256                          # embed_dim (768 for the real CLIP teacher)

    key = jax.random.PRNGKey(0)
    kx, ke, kt, kd = jax.random.split(key, 4)

    x = jax.random.normal(kx, (B, in_chans, img, img), jnp.float32)   # NCHW input

    params = {
        "w_enc": 0.05 * jax.random.normal(ke, (C, in_chans * patch * patch), jnp.float32),
        "b_enc": jnp.zeros((C,), jnp.float32),
        "w_tch": 0.05 * jax.random.normal(kt, (E, in_chans * patch * patch), jnp.float32),
        "b_tch": jnp.zeros((E,), jnp.float32),
        "w_dec": 0.05 * jax.random.normal(kd, (E, C), jnp.float32),   # Conv1d(C->E, k=1)
        "b_dec": jnp.zeros((E,), jnp.float32),
    }

    # tile_n=48 at these toy shapes forces a multi-tile grid (128 rows -> 3 tiles with a
    # partial last tile) so the per-tile-partials + last-tile-mask paths are exercised.
    out_multi = fd_forward(x, params, patch, tile_n=48)
    loss_multi = jax.block_until_ready(out_multi["loss"])

    # Default tile size collapses to a single full tile (no-mask path).
    out_single = fd_forward(x, params, patch)
    loss_single = jax.block_until_ready(out_single["loss"])

    # Sanity check against the pure-JAX reference on the same bf16-rounded operands.
    z = encoder_stub(x, params["w_enc"], params["b_enc"], patch).reshape(N, C)
    tgt = teacher_stub(x, params["w_tch"], params["b_tch"], patch).reshape(N, E)
    z_f = z.astype(jnp.float32)
    tgt_f = tgt.astype(jnp.float32)
    w_f = params["w_dec"].astype(jnp.bfloat16).astype(jnp.float32)
    ref = fd_loss_ref(z_f, w_f, params["b_dec"].reshape(1, E), tgt_f)

    assert jnp.allclose(loss_multi, ref, rtol=5e-3, atol=1e-4), (loss_multi, ref)
    assert jnp.allclose(loss_single, ref, rtol=5e-3, atol=1e-4), (loss_single, ref)

    print("KERNEL_OK")
</pallas_src>

<mosaic_0001>
module attributes {stable_mosaic.version = 11 : i64} {
  func.func @kernel(%arg0: i32, %arg1: memref<48x128xbf16, #tpu.memory_space<vmem>>, %arg2: memref<128x256xbf16, #tpu.memory_space<vmem>>, %arg3: memref<1x256xf32, #tpu.memory_space<vmem>>, %arg4: memref<48x256xbf16, #tpu.memory_space<vmem>>, %arg5: memref<1x8x128xf32, #tpu.memory_space<vmem>>) attributes {dimension_semantics = [#tpu.dimension_semantics<parallel>], iteration_bounds = array<i64: 3>, scalar_prefetch = 0 : i64, scratch_operands = 0 : i64, tpu.core_type = #tpu.core_type<tc>, window_params = [{transform_indices = @transform_0, window_bounds = array<i64: 48, 128>}, {pipeline_mode = #tpu.pipeline_mode<synchronous>, transform_indices = @transform_1, window_bounds = array<i64: 128, 256>}, {pipeline_mode = #tpu.pipeline_mode<synchronous>, transform_indices = @transform_2, window_bounds = array<i64: 1, 256>}, {transform_indices = @transform_3, window_bounds = array<i64: 48, 256>}, {transform_indices = @transform_4, window_bounds = array<i64: 1, 8, 128>}]} {
    %c0 = arith.constant 0 : index
    %c0_0 = arith.constant 0 : index
    %0 = vector.load %arg1[%c0, %c0_0] : memref<48x128xbf16, #tpu.memory_space<vmem>>, vector<48x128xbf16>
    %c0_1 = arith.constant 0 : index
    %c0_2 = arith.constant 0 : index
    %1 = vector.load %arg2[%c0_1, %c0_2] : memref<128x256xbf16, #tpu.memory_space<vmem>>, vector<128x256xbf16>
    %c0_3 = arith.constant 0 : index
    %c0_4 = arith.constant 0 : index
    %2 = vector.load %arg3[%c0_3, %c0_4] : memref<1x256xf32, #tpu.memory_space<vmem>>, vector<1x256xf32>
    %c0_5 = arith.constant 0 : index
    %c0_6 = arith.constant 0 : index
    %3 = vector.load %arg4[%c0_5, %c0_6] : memref<48x256xbf16, #tpu.memory_space<vmem>>, vector<48x256xbf16>
    %4 = arith.extf %3 : vector<48x256xbf16> to vector<48x256xf32>
    %cst = arith.constant dense<0.000000e+00> : vector<48x256xf32>
    %5 = tpu.matmul %0, %1, %cst {dimension_numbers = #tpu.dot_dimension_numbers<[1], [0], [0], [1], [0, 0, 1, 1], [], []>} : vector<48x128xbf16>, vector<128x256xbf16>, vector<48x256xf32> -> vector<48x256xf32>
    %6 = vector.broadcast %2 : vector<1x256xf32> to vector<48x256xf32>
    %7 = arith.addf %5, %6 : vector<48x256xf32>
    %cst_7 = arith.constant dense<0.000000e+00> : vector<48xf32>
    %8 = vector.multi_reduction <add>, %4, %cst_7 [1] : vector<48x256xf32> to vector<48xf32>
    %9 = vector.shape_cast %8 : vector<48xf32> to vector<48x1xf32>
    %cst_8 = arith.constant 2.560000e+02 : f32
    %10 = vector.broadcast %cst_8 : f32 to vector<48x1xf32>
    %11 = arith.divf %9, %10 : vector<48x1xf32>
    %12 = vector.broadcast %11 : vector<48x1xf32> to vector<48x256xf32>
    %13 = arith.subf %4, %12 : vector<48x256xf32>
    %14 = arith.mulf %13, %13 : vector<48x256xf32>
    %cst_9 = arith.constant dense<0.000000e+00> : vector<48xf32>
    %15 = vector.multi_reduction <add>, %14, %cst_9 [1] : vector<48x256xf32> to vector<48xf32>
    %16 = vector.shape_cast %15 : vector<48xf32> to vector<48x1xf32>
    %cst_10 = arith.constant 2.560000e+02 : f32
    %17 = vector.broadcast %cst_10 : f32 to vector<48x1xf32>
    %18 = arith.divf %16, %17 : vector<48x1xf32>
    %cst_11 = arith.constant 9.99999974E-6 : f32
    %19 = vector.broadcast %cst_11 : f32 to vector<48x1xf32>
    %20 = arith.addf %18, %19 : vector<48x1xf32>
    %21 = math.rsqrt %20 : vector<48x1xf32>
    %22 = vector.broadcast %21 : vector<48x1xf32> to vector<48x256xf32>
    %23 = arith.mulf %13, %22 : vector<48x256xf32>
    %24 = arith.subf %7, %23 : vector<48x256xf32>
    %25 = math.absf %24 : vector<48x256xf32>
    %cst_12 = arith.constant 2.000000e+00 : f32
    %26 = vector.broadcast %cst_12 : f32 to vector<48x256xf32>
    %27 = arith.cmpf olt, %25, %26 : vector<48x256xf32>
    %cst_13 = arith.constant 2.500000e-01 : f32
    %28 = vector.broadcast %cst_13 : f32 to vector<48x256xf32>
    %29 = arith.mulf %28, %24 : vector<48x256xf32>
    %30 = arith.mulf %29, %24 : vector<48x256xf32>
    %cst_14 = arith.constant 1.000000e+00 : f32
    %31 = vector.broadcast %cst_14 : f32 to vector<48x256xf32>
    %32 = arith.subf %25, %31 : vector<48x256xf32>
    %33 = arith.select %27, %30, %32 : vector<48x256xi1>, vector<48x256xf32>
    %c2_i32 = arith.constant 2 : i32
    %34 = arith.cmpi ne, %arg0, %c2_i32 : i32
    %35 = arith.extui %34 : i1 to i32
    %c0_i32 = arith.constant 0 : i32
    %36 = arith.cmpi ne, %35, %c0_i32 : i32
    scf.if %36 {
      %40 = vector.shape_cast %33 : vector<48x256xf32> to vector<1x48x256xf32>
      %cst_17 = arith.constant dense<0.000000e+00> : vector<1xf32>
      %41 = vector.multi_reduction <add>, %40, %cst_17 [1, 2] : vector<1x48x256xf32> to vector<1xf32>
      %42 = vector.shape_cast %41 : vector<1xf32> to vector<1x1x1xf32>
      %43 = vector.extract %42[0, 0, 0] : f32 from vector<1x1x1xf32>
      %44 = vector.broadcast %43 : f32 to vector<1x8x128xf32>
      %c0_18 = arith.constant 0 : index
      %c0_19 = arith.constant 0 : index
      %c0_20 = arith.constant 0 : index
      %45 = vector.load %arg5[%c0_18, %c0_19, %c0_20] : memref<1x8x128xf32, #tpu.memory_space<vmem>>, vector<1x8x128xf32>
      tpu.vector_store %arg5[%c0_18, %c0_19, %c0_20], %44 {strides = array<i32>} : memref<1x8x128xf32, #tpu.memory_space<vmem>>, vector<1x8x128xf32>,
    } else {
    }
    %c2_i32_15 = arith.constant 2 : i32
    %37 = arith.cmpi eq, %arg0, %c2_i32_15 : i32
    %38 = arith.extui %37 : i1 to i32
    %c0_i32_16 = arith.constant 0 : i32
    %39 = arith.cmpi ne, %38, %c0_i32_16 : i32
    scf.if %39 {
      %c48_i32 = arith.constant 48 : i32
      %40 = arith.muli %arg0, %c48_i32 : i32
      %41 = tpu.iota {dimensions = array<i32: 0>} : vector<48x256xi32>
      %42 = vector.broadcast %40 : i32 to vector<48x256xi32>
      %43 = arith.addi %42, %41 : vector<48x256xi32>
      %c128_i32 = arith.constant 128 : i32
      %44 = vector.broadcast %c128_i32 : i32 to vector<48x256xi32>
      %45 = arith.cmpi slt, %43, %44 : vector<48x256xi32>
      %cst_17 = arith.constant 0.000000e+00 : f32
      %46 = vector.broadcast %cst_17 : f32 to vector<48x256xf32>
      %47 = arith.select %45, %33, %46 : vector<48x256xi1>, vector<48x256xf32>
      %48 = vector.shape_cast %47 : vector<48x256xf32> to vector<1x48x256xf32>
      %cst_18 = arith.constant dense<0.000000e+00> : vector<1xf32>
      %49 = vector.multi_reduction <add>, %48, %cst_18 [1, 2] : vector<1x48x256xf32> to vector<1xf32>
      %50 = vector.shape_cast %49 : vector<1xf32> to vector<1x1x1xf32>
      %51 = vector.extract %50[0, 0, 0] : f32 from vector<1x1x1xf32>
      %52 = vector.broadcast %51 : f32 to vector<1x8x128xf32>
      %c0_19 = arith.constant 0 : index
      %c0_20 = arith.constant 0 : index
      %c0_21 = arith.constant 0 : index
      %53 = vector.load %arg5[%c0_19, %c0_20, %c0_21] : memref<1x8x128xf32, #tpu.memory_space<vmem>>, vector<1x8x128xf32>
      tpu.vector_store %arg5[%c0_19, %c0_20, %c0_21], %52 {strides = array<i32>} : memref<1x8x128xf32, #tpu.memory_space<vmem>>, vector<1x8x128xf32>,
    } else {
    }
    return
  }
  func.func @transform_0(%arg0: i32) -> (i32, i32) {
    %c0_i32 = arith.constant 0 : i32
    %c0_i32_0 = arith.constant 0 : i32
    return %arg0, %c0_i32 : i32, i32
  }
  func.func @transform_1(%arg0: i32) -> (i32, i32) {
    %c0_i32 = arith.constant 0 : i32
    %c0_i32_0 = arith.constant 0 : i32
    %c0_i32_1 = arith.constant 0 : i32
    return %c0_i32, %c0_i32_0 : i32, i32
  }
  func.func @transform_2(%arg0: i32) -> (i32, i32) {
    %c0_i32 = arith.constant 0 : i32
    %c0_i32_0 = arith.constant 0 : i32
    %c0_i32_1 = arith.constant 0 : i32
    return %c0_i32, %c0_i32_0 : i32, i32
  }
  func.func @transform_3(%arg0: i32) -> (i32, i32) {
    %c0_i32 = arith.constant 0 : i32
    %c0_i32_0 = arith.constant 0 : i32
    return %arg0, %c0_i32 : i32, i32
  }
  func.func @transform_4(%arg0: i32) -> (i32, i32, i32) {
    %c0_i32 = arith.constant 0 : i32
    %c0_i32_0 = arith.constant 0 : i32
    %c0_i32_1 = arith.constant 0 : i32
    return %arg0, %c0_i32, %c0_i32_0 : i32, i32, i32
  }
}

module attributes {stable_mosaic.version = 11 : i64} {
  func.func @kernel(%arg0: i32, %arg1: memref<48x128xbf16, #tpu.memory_space<vmem>>, %arg2: memref<128x256xbf16, #tpu.memory_space<vmem>>, %arg3: memref<1x256xf32, #tpu.memory_space<vmem>>, %arg4: memref<48x256xbf16, #tpu.memory_space<vmem>>, %arg5: memref<1x8x128xf32, #tpu.memory_space<vmem>>) attributes {dimension_semantics = [#tpu.dimension_semantics<parallel>], iteration_bounds = array<i64: 3>, scalar_prefetch = 0 : i64, scratch_operands = 0 : i64, tpu.core_type = #tpu.core_type<tc>, window_params = [{transform_indices = @transform_0, window_bounds = array<i64: 48, 128>}, {pipeline_mode = #tpu.pipeline_mode<synchronous>, transform_indices = @transform_1, window_bounds = array<i64: 128, 256>}, {pipeline_mode = #tpu.pipeline_mode<synchronous>, transform_indices = @transform_2, window_bounds = array<i64: 1, 256>}, {transform_indices = @transform_3, window_bounds = array<i64: 48, 256>}, {transform_indices = @transform_4, window_bounds = array<i64: 1, 8, 128>}]} {
    %c0 = arith.constant 0 : index
    %c0_0 = arith.constant 0 : index
    %0 = vector.load %arg1[%c0, %c0_0] : memref<48x128xbf16, #tpu.memory_space<vmem>>, vector<48x128xbf16>
    %c0_1 = arith.constant 0 : index
    %c0_2 = arith.constant 0 : index
    %1 = vector.load %arg2[%c0_1, %c0_2] : memref<128x256xbf16, #tpu.memory_space<vmem>>, vector<128x256xbf16>
    %c0_3 = arith.constant 0 : index
    %c0_4 = arith.constant 0 : index
    %2 = vector.load %arg3[%c0_3, %c0_4] : memref<1x256xf32, #tpu.memory_space<vmem>>, vector<1x256xf32>
    %c0_5 = arith.constant 0 : index
    %c0_6 = arith.constant 0 : index
    %3 = vector.load %arg4[%c0_5, %c0_6] : memref<48x256xbf16, #tpu.memory_space<vmem>>, vector<48x256xbf16>
    %4 = arith.extf %3 : vector<48x256xbf16> to vector<48x256xf32>
    %cst = arith.constant dense<0.000000e+00> : vector<48x256xf32>
    %5 = tpu.matmul %0, %1, %cst {dimension_numbers = #tpu.dot_dimension_numbers<[1], [0], [0], [1], [0, 0, 1, 1], [], []>} : vector<48x128xbf16>, vector<128x256xbf16>, vector<48x256xf32> -> vector<48x256xf32>
    %6 = vector.broadcast %2 : vector<1x256xf32> to vector<48x256xf32>
    %7 = arith.addf %5, %6 : vector<48x256xf32>
    %cst_7 = arith.constant dense<0.000000e+00> : vector<48xf32>
    %8 = vector.multi_reduction <add>, %4, %cst_7 [1] : vector<48x256xf32> to vector<48xf32>
    %9 = vector.shape_cast %8 : vector<48xf32> to vector<48x1xf32>
    %cst_8 = arith.constant 2.560000e+02 : f32
    %10 = vector.broadcast %cst_8 : f32 to vector<48x1xf32>
    %11 = arith.divf %9, %10 : vector<48x1xf32>
    %12 = vector.broadcast %11 : vector<48x1xf32> to vector<48x256xf32>
    %13 = arith.subf %4, %12 : vector<48x256xf32>
    %14 = arith.mulf %13, %13 : vector<48x256xf32>
    %cst_9 = arith.constant dense<0.000000e+00> : vector<48xf32>
    %15 = vector.multi_reduction <add>, %14, %cst_9 [1] : vector<48x256xf32> to vector<48xf32>
    %16 = vector.shape_cast %15 : vector<48xf32> to vector<48x1xf32>
    %cst_10 = arith.constant 2.560000e+02 : f32
    %17 = vector.broadcast %cst_10 : f32 to vector<48x1xf32>
    %18 = arith.divf %16, %17 : vector<48x1xf32>
    %cst_11 = arith.constant 9.99999974E-6 : f32
    %19 = vector.broadcast %cst_11 : f32 to vector<48x1xf32>
    %20 = arith.addf %18, %19 : vector<48x1xf32>
    %21 = math.rsqrt %20 : vector<48x1xf32>
    %22 = vector.broadcast %21 : vector<48x1xf32> to vector<48x256xf32>
    %23 = arith.mulf %13, %22 : vector<48x256xf32>
    %24 = arith.subf %7, %23 : vector<48x256xf32>
    %25 = math.absf %24 : vector<48x256xf32>
    %cst_12 = arith.constant 2.000000e+00 : f32
    %26 = vector.broadcast %cst_12 : f32 to vector<48x256xf32>
    %27 = arith.cmpf olt, %25, %26 : vector<48x256xf32>
    %cst_13 = arith.constant 2.500000e-01 : f32
    %28 = vector.broadcast %cst_13 : f32 to vector<48x256xf32>
    %29 = arith.mulf %28, %24 : vector<48x256xf32>
    %30 = arith.mulf %29, %24 : vector<48x256xf32>
    %cst_14 = arith.constant 1.000000e+00 : f32
    %31 = vector.broadcast %cst_14 : f32 to vector<48x256xf32>
    %32 = arith.subf %25, %31 : vector<48x256xf32>
    %33 = arith.select %27, %30, %32 : vector<48x256xi1>, vector<48x256xf32>
    %c2_i32 = arith.constant 2 : i32
    %34 = arith.cmpi ne, %arg0, %c2_i32 : i32
    %35 = arith.extui %34 : i1 to i32
    %c0_i32 = arith.constant 0 : i32
    %36 = arith.cmpi ne, %35, %c0_i32 : i32
    scf.if %36 {
      %40 = vector.shape_cast %33 : vector<48x256xf32> to vector<1x48x256xf32>
      %cst_17 = arith.constant dense<0.000000e+00> : vector<1xf32>
      %41 = vector.multi_reduction <add>, %40, %cst_17 [1, 2] : vector<1x48x256xf32> to vector<1xf32>
      %42 = vector.shape_cast %41 : vector<1xf32> to vector<1x1x1xf32>
      %43 = vector.extract %42[0, 0, 0] : f32 from vector<1x1x1xf32>
      %44 = vector.broadcast %43 : f32 to vector<1x8x128xf32>
      %c0_18 = arith.constant 0 : index
      %c0_19 = arith.constant 0 : index
      %c0_20 = arith.constant 0 : index
      %45 = vector.load %arg5[%c0_18, %c0_19, %c0_20] : memref<1x8x128xf32, #tpu.memory_space<vmem>>, vector<1x8x128xf32>
      tpu.vector_store %arg5[%c0_18, %c0_19, %c0_20], %44 {strides = array<i32>} : memref<1x8x128xf32, #tpu.memory_space<vmem>>, vector<1x8x128xf32>,
    } else {
    }
    %c2_i32_15 = arith.constant 2 : i32
    %37 = arith.cmpi eq, %arg0, %c2_i32_15 : i32
    %38 = arith.extui %37 : i1 to i32
    %c0_i32_16 = arith.constant 0 : i32
    %39 = arith.cmpi ne, %38, %c0_i32_16 : i32
    scf.if %39 {
      %c48_i32 = arith.constant 48 : i32
      %40 = arith.muli %arg0, %c48_i32 : i32
      %41 = tpu.iota {dimensions = array<i32: 0>} : vector<48x256xi32>
      %42 = vector.broadcast %40 : i32 to vector<48x256xi32>
      %43 = arith.addi %42, %41 : vector<48x256xi32>
      %c128_i32 = arith.constant 128 : i32
      %44 = vector.broadcast %c128_i32 : i32 to vector<48x256xi32>
      %45 = arith.cmpi slt, %43, %44 : vector<48x256xi32>
      %cst_17 = arith.constant 0.000000e+00 : f32
      %46 = vector.broadcast %cst_17 : f32 to vector<48x256xf32>
      %47 = arith.select %45, %33, %46 : vector<48x256xi1>, vector<48x256xf32>
      %48 = vector.shape_cast %47 : vector<48x256xf32> to vector<1x48x256xf32>
      %cst_18 = arith.constant dense<0.000000e+00> : vector<1xf32>
      %49 = vector.multi_reduction <add>, %48, %cst_18 [1, 2] : vector<1x48x256xf32> to vector<1xf32>
      %50 = vector.shape_cast %49 : vector<1xf32> to vector<1x1x1xf32>
      %51 = vector.extract %50[0, 0, 0] : f32 from vector<1x1x1xf32>
      %52 = vector.broadcast %51 : f32 to vector<1x8x128xf32>
      %c0_19 = arith.constant 0 : index
      %c0_20 = arith.constant 0 : index
      %c0_21 = arith.constant 0 : index
      %53 = vector.load %arg5[%c0_19, %c0_20, %c0_21] : memref<1x8x128xf32, #tpu.memory_space<vmem>>, vector<1x8x128xf32>
      tpu.vector_store %arg5[%c0_19, %c0_20, %c0_21], %52 {strides = array<i32>} : memref<1x8x128xf32, #tpu.memory_space<vmem>>, vector<1x8x128xf32>,
    } else {
    }
    return
  }
  func.func @transform_0(%arg0: i32) -> (i32, i32) {
    %c0_i32 = arith.constant 0 : i32
    %c0_i32_0 = arith.constant 0 : i32
    return %arg0, %c0_i32 : i32, i32
  }
  func.func @transform_1(%arg0: i32) -> (i32, i32) {
    %c0_i32 = arith.constant 0 : i32
    %c0_i32_0 = arith.constant 0 : i32
    %c0_i32_1 = arith.constant 0 : i32
    return %c0_i32, %c0_i32_0 : i32, i32
  }
  func.func @transform_2(%arg0: i32) -> (i32, i32) {
    %c0_i32 = arith.constant 0 : i32
    %c0_i32_0 = arith.constant 0 : i32
    %c0_i32_1 = arith.constant 0 : i32
    return %c0_i32, %c0_i32_0 : i32, i32
  }
  func.func @transform_3(%arg0: i32) -> (i32, i32) {
    %c0_i32 = arith.constant 0 : i32
    %c0_i32_0 = arith.constant 0 : i32
    return %arg0, %c0_i32 : i32, i32
  }
  func.func @transform_4(%arg0: i32) -> (i32, i32, i32) {
    %c0_i32 = arith.constant 0 : i32
    %c0_i32_0 = arith.constant 0 : i32
    %c0_i32_1 = arith.constant 0 : i32
    return %arg0, %c0_i32, %c0_i32_0 : i32, i32, i32
  }
}

</mosaic_0001>

<llo_original>
// kernel: tpu_custom_call.1
$region0: #{tpu_custom_call.1}
  #allocation0 [shape = 'u32[]', space=smem, size = 0x4, offset = 0x4, fixed_abs, tag = 'smem constant byte address 0x4 - core index']
  #allocation1 [shape = 'u32[72,128]{1,0:T(1,128)}', space=vmem, size = 0x9000, scoped, tag = 'internal scratch']
  %s0 = inlined_call_operand.hbm [shape: bf16[128,128], index: 0, kind: input, shape index: {}]
  %s1 = inlined_call_operand.hbm [shape: bf16[128,256], index: 1, kind: input, shape index: {}]
  %s2 = inlined_call_operand.hbm [shape: f32[1,256], index: 2, kind: input, shape index: {}]
  %s3 = inlined_call_operand.hbm [shape: bf16[128,256], index: 3, kind: input, shape index: {}]
  %s4 = inlined_call_operand.hbm [shape: f32[3,8,128], index: 4, kind: output, shape index: {}]
  %s5 = sld [smem:[#allocation0]]
  $region73: #{tpu_custom_call.1} parent=0
    _
  %s7 = ssub.s32 1, %s5
  %s8 = scalar_select 0, %s7, %s5
  $region1: #{tpu_custom_call.1} parent=0
    #allocation2 [shape = 'u8[24576]{0}', space=vmem, size = 0x6000, scoped, tag = 'input window, operand 0']
    #allocation3 [shape = 's32[2]{0}', space=sflag, size = 0x8, scoped, tag = 'scoped memory for tpu_custom_call.1']
    #allocation4 [shape = 's32[2]{0}', space=sflag, size = 0x8, scoped, tag = 'scoped memory for tpu_custom_call.1']
    #allocation5 [shape = 'u8[65536]{0}', space=vmem, size = 0x10000, scoped, tag = 'input window, operand 1, single buffered']
    #allocation6 [shape = 's32[1]{0}', space=sflag, size = 0x4, scoped, tag = 'scoped memory for tpu_custom_call.1']
    #allocation7 [shape = 'u8[1024]{0}', space=vmem, size = 0x400, scoped, tag = 'input window, operand 2, single buffered']
    #allocation8 [shape = 'u8[49152]{0}', space=vmem, size = 0xc000, scoped, tag = 'input window, operand 3']
    #allocation9 [shape = 's32[2]{0}', space=sflag, size = 0x8, scoped, tag = 'scoped memory for tpu_custom_call.1']
    #allocation10 [shape = 'u8[8192]{0}', space=vmem, size = 0x2000, scoped, tag = 'output window, operand 0']
    %9 = vsyncpa [#allocation3], 0
    %s10 = scalar_lea.sflag [#allocation3], 1
    %11 = vsyncpa %s10, 0
    %12 = vsyncpa [#allocation6], 0
    %13 = vsyncpa [#allocation9], 0
    %s14 = scalar_lea.sflag [#allocation9], 1
    %15 = vsyncpa %s14, 0
    %16 = vsyncpa [#allocation4], 0
    %s17 = scalar_lea.sflag [#allocation4], 1
    %18 = vsyncpa %s17, 0
    loop: start=0, step=1, limit=5
    $region2: #{tpu_custom_call.1} parent=1 // loop_pre_header
      _
    $region3: #{tpu_custom_call.1} parent=1 // loop_header
      %s20 = sphi 0, %s24
      %p21 = scmp.ge.s32.totalorder %s20, 5
      %s30 = sphi 0, %s32
      %s33 = sphi 0, %s30
      %s34 = sphi 0, %s33
      %s50 = sphi 0, %s34
      %s54 = sphi 0, %s54
      %s56 = sphi 0, %s54
      %s57 = sphi 0, %s56
      %s71 = sphi 0, %s57
      %s75 = sphi 0, %s75
      %s77 = sphi 0, %s75
      %s78 = sphi 0, %s77
      %s92 = sphi 0, %s78
      %s98 = sphi 0, %s100
      %s101 = sphi 0, %s98
      %s102 = sphi 0, %s101
      %s118 = sphi 0, %s102
      %s124 = sphi 0, %s126
      %s127 = sphi 0, %s124
      %s128 = sphi 0, %s127
      %s144 = sphi 0, %s128
    $region4: #{tpu_custom_call.1} parent=1 // loop_header_branch
      %23 = sbr.rel (%p21) target = $region8
    $region5: #{tpu_custom_call.1} parent=1 // loop_body
      %s25 = ssub.s32 %s20, 1
      %s26 = ssub.s32 %s20, 2
      %s27 = sadd.s32 %s20, 1
      %s28 = ssub.s32 %s20, %s27
      %p29 = scmp.eq.s32.totalorder %s28, 0
      %s31 = sadd.s32 %s30, 1
      %s32 = scalar_select %p29, %s30, %s31
      %p35 = pneg %p29
      %p36 = scmp.eq.s32.totalorder %s20, 2
      %p37 = por %p35, %p36
      %p38 = scmp.ne.s32.totalorder %s30, %s33
      %p39 = scmp.eq.s32.totalorder %s20, 0
      %p40 = por %p38, %p39
      %p41 = scmp.ne.s32.totalorder %s30, %s33
      %p42 = scmp.eq.s32.totalorder %s25, 2
      %p43 = por %p41, %p42
      %p44 = scmp.ne.s32.totalorder %s33, %s34
      %p45 = scmp.eq.s32.totalorder %s25, 0
      %p46 = por %p44, %p45
      %p47 = scmp.ne.s32.totalorder %s33, %s34
      %p48 = scmp.eq.s32.totalorder %s26, 2
      %p49 = por %p47, %p48
      %p51 = scmp.ne.s32.totalorder %s34, %s50
      %p52 = scmp.eq.s32.totalorder %s26, 0
      %p53 = por %p51, %p52
      %s55 = sadd.s32 %s54, 1
      %p58 = scmp.eq.s32.totalorder %s20, 2
      %p59 = scmp.ne.s32.totalorder %s54, %s56
      %p60 = scmp.eq.s32.totalorder %s20, 0
      %p61 = por %p59, %p60
      %p62 = scmp.ne.s32.totalorder %s54, %s56
      %p63 = scmp.eq.s32.totalorder %s25, 2
      %p64 = por %p62, %p63
      %p65 = scmp.ne.s32.totalorder %s56, %s57
      %p66 = scmp.eq.s32.totalorder %s25, 0
      %p67 = por %p65, %p66
      %p68 = scmp.ne.s32.totalorder %s56, %s57
      %p69 = scmp.eq.s32.totalorder %s26, 2
      %p70 = por %p68, %p69
      %p72 = scmp.ne.s32.totalorder %s57, %s71
      %p73 = scmp.eq.s32.totalorder %s26, 0
      %p74 = por %p72, %p73
      %s76 = sadd.s32 %s75, 1
      %p79 = scmp.eq.s32.totalorder %s20, 2
      %p80 = scmp.ne.s32.totalorder %s75, %s77
      %p81 = scmp.eq.s32.totalorder %s20, 0
      %p82 = por %p80, %p81
      %p83 = scmp.ne.s32.totalorder %s75, %s77
      %p84 = scmp.eq.s32.totalorder %s25, 2
      %p85 = por %p83, %p84
      %p86 = scmp.ne.s32.totalorder %s77, %s78
      %p87 = scmp.eq.s32.totalorder %s25, 0
      %p88 = por %p86, %p87
      %p89 = scmp.ne.s32.totalorder %s77, %s78
      %p90 = scmp.eq.s32.totalorder %s26, 2
      %p91 = por %p89, %p90
      %p93 = scmp.ne.s32.totalorder %s78, %s92
      %p94 = scmp.eq.s32.totalorder %s26, 0
      %p95 = por %p93, %p94
      %s96 = ssub.s32 %s20, %s27
      %p97 = scmp.eq.s32.totalorder %s96, 0
      %s99 = sadd.s32 %s98, 1
      %s100 = scalar_select %p97, %s98, %s99
      %p103 = pneg %p97
      %p104 = scmp.eq.s32.totalorder %s20, 2
      %p105 = por %p103, %p104
      %p106 = scmp.ne.s32.totalorder %s98, %s101
      %p107 = scmp.eq.s32.totalorder %s20, 0
      %p108 = por %p106, %p107
      %p109 = scmp.ne.s32.totalorder %s98, %s101
      %p110 = scmp.eq.s32.totalorder %s25, 2
      %p111 = por %p109, %p110
      %p112 = scmp.ne.s32.totalorder %s101, %s102
      %p113 = scmp.eq.s32.totalorder %s25, 0
      %p114 = por %p112, %p113
      %p115 = scmp.ne.s32.totalorder %s101, %s102
      %p116 = scmp.eq.s32.totalorder %s26, 2
      %p117 = por %p115, %p116
      %p119 = scmp.ne.s32.totalorder %s102, %s118
      %p120 = scmp.eq.s32.totalorder %s26, 0
      %p121 = por %p119, %p120
      %s122 = ssub.s32 %s20, %s27
      %p123 = scmp.eq.s32.totalorder %s122, 0
      %s125 = sadd.s32 %s124, 1
      %s126 = scalar_select %p123, %s124, %s125
      %p129 = pneg %p123
      %p130 = scmp.eq.s32.totalorder %s20, 2
      %p131 = por %p129, %p130
      %p132 = scmp.ne.s32.totalorder %s124, %s127
      %p133 = scmp.eq.s32.totalorder %s20, 0
      %p134 = por %p132, %p133
      %p135 = scmp.ne.s32.totalorder %s124, %s127
      %p136 = scmp.eq.s32.totalorder %s25, 2
      %p137 = por %p135, %p136
      %p138 = scmp.ne.s32.totalorder %s127, %s128
      %p139 = scmp.eq.s32.totalorder %s25, 0
      %p140 = por %p138, %p139
      %p141 = scmp.ne.s32.totalorder %s127, %s128
      %p142 = scmp.eq.s32.totalorder %s26, 2
      %p143 = por %p141, %p142
      %p145 = scmp.ne.s32.totalorder %s128, %s144
      %p146 = scmp.eq.s32.totalorder %s26, 0
      %p147 = por %p145, %p146
      %p148 = scmp.le.s32.totalorder 1, %s20
      %p149 = scmp.lt.s32.totalorder %s20, 4
      %p150 = pnand %p148, %p149
      %p151 = pneg %p150
      // Predicated region
      $region9: #{tpu_custom_call.1} parent=5 // pred_check
        _
      $region10: #{tpu_custom_call.1} parent=5 // pred_check_branch
        %153 = sbr.rel (%p150) target = $region12
      $region11: #{tpu_custom_call.1} parent=5 // pred_region
        %s154 = ssub.s32 %s20, 1
        // Predicated region
        $region13: #{tpu_custom_call.1} parent=11 // pred_check
          %p155 = pneg %p67
        $region14: #{tpu_custom_call.1} parent=11 // pred_check_branch
          %157 = sbr.rel (%p155) target = $region16
        $region15: #{tpu_custom_call.1} parent=11 // pred_region
          %159 = vsyncadd [#allocation6], 0
          %s160 = sshll.u32 %s1, 4
          %s161 = int_to_ptr.hbm [resolvable:$true] %s160
          %s162 = sshll.u32 [#allocation5], 4
          %s163 = int_to_ptr.vmem [resolvable:$true] %s162
          %168 = dma.hbm_to_vmem [thread:$0]  %s161, 2048, %s163, [#allocation6], 128, 128, 8
        $region16: #{tpu_custom_call.1} parent=11 // pred_fallthru
          _
        // Predicated region
        $region17: #{tpu_custom_call.1} parent=11 // pred_check
          %p169 = pneg %p88
        $region18: #{tpu_custom_call.1} parent=11 // pred_check_branch
          %171 = sbr.rel (%p169) target = $region20
        $region19: #{tpu_custom_call.1} parent=11 // pred_region
          %173 = vsyncadd [#allocation6], 0
          %s175 = sshll.u32 %s2, 4
          %s176 = int_to_ptr.hbm [resolvable:$true] %s175
          %s177 = sshll.u32 [#allocation7], 4
          %s178 = int_to_ptr.vmem [resolvable:$true] %s177
          %180 = dma.hbm_to_vmem [thread:$0]  %s176, 32, %s178, [#allocation6]
        $region20: #{tpu_custom_call.1} parent=11 // pred_fallthru
          _
      $region12: #{tpu_custom_call.1} parent=5 // pred_fallthru
        _
      %p181 = scmp.lt.s32.totalorder %s20, 3
      // Predicated region
      $region21: #{tpu_custom_call.1} parent=5 // pred_check
        %p182 = pneg %p181
      $region22: #{tpu_custom_call.1} parent=5 // pred_check_branch
        %184 = sbr.rel (%p182) target = $region24
      $region23: #{tpu_custom_call.1} parent=5 // pred_region
        // Predicated region
        $region25: #{tpu_custom_call.1} parent=23 // pred_check
          %p185 = pneg %p40
        $region26: #{tpu_custom_call.1} parent=23 // pred_check_branch
          %187 = sbr.rel (%p185) target = $region28
        $region27: #{tpu_custom_call.1} parent=23 // pred_region
          %s188 = sand.u32 %s30, 1
          %s189 = scalar_lea.sflag [#allocation3], %s188
          %s190 = sand.u32 %s30, 1
          %s191 = smul.addr %s190, 24
          %s192 = scalar_lea.vmem [#allocation2], %s191
          %s193 = smul.u32 6, %s20
          %s194 = ssub.s32 16, %s193
          %p195 = scmp.lt.s32.totalorder %s194, 6
          %s196 = scalar_select %p195, %s194, 6
          %s197 = smul.u32 4, %s196
          %s198 = ssub.s32 24, %s197
          %s199 = sshll.u32 %s198, 4
          %200 = vsyncadd %s189, %s199
          %p201 = scmp.ne.s32.totalorder 0, %s197
          %s202 = smul.addr %s193, 4
          %s203 = scalar_lea.hbm %s0, %s202
          %s204 = smul.u32 4, %s196
          %s205 = sshll.u32 %s203, 4
          %s206 = int_to_ptr.hbm [resolvable:$true] %s205
          %s207 = sshll.u32 %s192, 4
          %s208 = int_to_ptr.vmem [resolvable:$true] %s207
          %s209 = sshll.u32 %s204, 4
          %213 = dma.hbm_to_vmem [thread:$0]  (%p201), %s206, %s209, %s208, %s189, 64, 64, 4
        $region28: #{tpu_custom_call.1} parent=23 // pred_fallthru
          _
        // Predicated region
        $region29: #{tpu_custom_call.1} parent=23 // pred_check
          %p214 = pneg %p108
        $region30: #{tpu_custom_call.1} parent=23 // pred_check_branch
          %216 = sbr.rel (%p214) target = $region32
        $region31: #{tpu_custom_call.1} parent=23 // pred_region
          %s217 = sand.u32 %s98, 1
          %s218 = scalar_lea.sflag [#allocation9], %s217
          %s219 = sand.u32 %s98, 1
          %s220 = smul.addr %s219, 48
          %s221 = scalar_lea.vmem [#allocation8], %s220
          %s222 = smul.u32 6, %s20
          %s223 = ssub.s32 16, %s222
          %p224 = scmp.lt.s32.totalorder %s223, 6
          %s225 = scalar_select %p224, %s223, 6
          %s226 = smul.u32 4, %s225
          %s227 = smul.u32 %s226, 2
          %s228 = ssub.s32 48, %s227
          %s229 = sshll.u32 %s228, 4
          %230 = vsyncadd %s218, %s229
          %p231 = scmp.ne.s32.totalorder 0, %s227
          %s232 = smul.addr %s222, 2
          %s233 = smul.addr %s232, 4
          %s234 = scalar_lea.hbm %s3, %s233
          %s235 = smul.u32 8, %s225
          %s236 = sshll.u32 %s234, 4
          %s237 = int_to_ptr.hbm [resolvable:$true] %s236
          %s238 = sshll.u32 %s221, 4
          %s239 = int_to_ptr.vmem [resolvable:$true] %s238
          %s240 = sshll.u32 %s235, 4
          %244 = dma.hbm_to_vmem [thread:$0]  (%p231), %s237, %s240, %s239, %s218, 128, 128, 8
        $region32: #{tpu_custom_call.1} parent=23 // pred_fallthru
          _
      $region24: #{tpu_custom_call.1} parent=5 // pred_fallthru
        _
      %p245 = scmp.le.s32.totalorder 1, %s20
      %p246 = scmp.lt.s32.totalorder %s20, 4
      %p247 = pnand %p245, %p246
      %p248 = pneg %p247
      // Predicated region
      $region33: #{tpu_custom_call.1} parent=5 // pred_check
        _
      $region34: #{tpu_custom_call.1} parent=5 // pred_check_branch
        %250 = sbr.rel (%p247) target = $region36
      $region35: #{tpu_custom_call.1} parent=5 // pred_region
        %s251 = ssub.s32 %s20, 1
        %s252 = sand.u32 %s33, 1
        %s253 = scalar_lea.sflag [#allocation3], %s252
        %s254 = sand.u32 %s33, 1
        %s255 = smul.addr %s254, 24
        %s256 = scalar_lea.vmem [#allocation2], %s255
        // Predicated region
        $region37: #{tpu_custom_call.1} parent=35 // pred_check
          %p257 = pneg %p46
        $region38: #{tpu_custom_call.1} parent=35 // pred_check_branch
          %259 = sbr.rel (%p257) target = $region40
        $region39: #{tpu_custom_call.1} parent=35 // pred_region
          %261 = dma.done %s253, 384
        $region40: #{tpu_custom_call.1} parent=35 // pred_fallthru
          _
        // Predicated region
        $region41: #{tpu_custom_call.1} parent=35 // pred_check
          %p262 = pneg %p67
        $region42: #{tpu_custom_call.1} parent=35 // pred_check_branch
          %264 = sbr.rel (%p262) target = $region44
        $region43: #{tpu_custom_call.1} parent=35 // pred_region
          %266 = dma.done [#allocation6], 2048
        $region44: #{tpu_custom_call.1} parent=35 // pred_fallthru
          _
        // Predicated region
        $region45: #{tpu_custom_call.1} parent=35 // pred_check
          %p267 = pneg %p88
        $region46: #{tpu_custom_call.1} parent=35 // pred_check_branch
          %269 = sbr.rel (%p267) target = $region48
        $region47: #{tpu_custom_call.1} parent=35 // pred_region
          %271 = dma.done [#allocation6], 32
        $region48: #{tpu_custom_call.1} parent=35 // pred_fallthru
          _
        %s272 = sand.u32 %s101, 1
        %s273 = scalar_lea.sflag [#allocation9], %s272
        %s274 = sand.u32 %s101, 1
        %s275 = smul.addr %s274, 48
        %s276 = scalar_lea.vmem [#allocation8], %s275
        // Predicated region
        $region49: #{tpu_custom_call.1} parent=35 // pred_check
          %p277 = pneg %p114
        $region50: #{tpu_custom_call.1} parent=35 // pred_check_branch
          %279 = sbr.rel (%p277) target = $region52
        $region51: #{tpu_custom_call.1} parent=35 // pred_region
          %281 = dma.done %s273, 768
        $region52: #{tpu_custom_call.1} parent=35 // pred_fallthru
          _
        %s282 = sand.u32 %s33, 1
        %s283 = scalar_lea.sflag [#allocation3], %s282
        %s284 = sand.u32 %s33, 1
        %s285 = smul.addr %s284, 24
        %s286 = scalar_lea.vmem [#allocation2], %s285
        %p287 = pneg %p46
        %p288 = pneg %p43
        %p289 = pneg %p67
        %p290 = pneg %p64
        %p291 = pneg %p88
        %p292 = pneg %p85
        %s293 = sand.u32 %s101, 1
        %s294 = scalar_lea.sflag [#allocation9], %s293
        %s295 = sand.u32 %s101, 1
        %s296 = smul.addr %s295, 48
        %s297 = scalar_lea.vmem [#allocation8], %s296
        %p298 = pneg %p114
        %p299 = pneg %p111
        %p300 = pneg %p140
        %p301 = pneg %p137
        %s302 = sand.u32 %s127, 1
        %s303 = scalar_lea.sflag [#allocation4], %s302
        %s304 = sand.u32 %s127, 1
        %s305 = smul.addr %s304, 8
        %s306 = scalar_lea.vmem [#allocation10], %s305
        %s307 = smul.u32 6, %s25
        %s308 = ssub.s32 16, %s307
        %p309 = scmp.lt.s32.totalorder %s308, 6
        %s310 = scalar_select %p309, %s308, 6
        %s311 = smul.u32 4, %s310
        %s312 = smul.u32 6, %s25
        %s313 = ssub.s32 16, %s312
        %p314 = scmp.lt.s32.totalorder %s313, 6
        %s315 = scalar_select %p314, %s313, 6
        %s316 = smul.u32 4, %s315
        %s317 = smul.u32 %s316, 2
        %v318 = vld [vmem:[%s256] sm:$0xf]
        %v319 = vld [vmem:[%s256 + $0x4] sm:$0xf]
        %v320 = vld [vmem:[%s256 + $0x8] sm:$0xf]
        %v321 = vld [vmem:[%s256 + $0xc] sm:$0xf]
        %v322 = vld [vmem:[%s256 + $0x10] sm:$0xf]
        %v323 = vld [vmem:[%s256 + $0x14] sm:$0xf]
        %v324 = vld [vmem:[#allocation5] sm:$0xff]
        %v325 = vld [vmem:[#allocation5 + $0x8] sm:$0xff]
        %v326 = vld [vmem:[#allocation5 + $0x10] sm:$0xff]
        %v327 = vld [vmem:[#allocation5 + $0x18] sm:$0xff]
        %v328 = vld [vmem:[#allocation5 + $0x20] sm:$0xff]
        %v329 = vld [vmem:[#allocation5 + $0x28] sm:$0xff]
        %v330 = vld [vmem:[#allocation5 + $0x30] sm:$0xff]
        %v331 = vld [vmem:[#allocation5 + $0x38] sm:$0xff]
        %v332 = vld [vmem:[#allocation5 + $0x40] sm:$0xff]
        %v333 = vld [vmem:[#allocation5 + $0x48] sm:$0xff]
        %v334 = vld [vmem:[#allocation5 + $0x50] sm:$0xff]
        %v335 = vld [vmem:[#allocation5 + $0x58] sm:$0xff]
        %v336 = vld [vmem:[#allocation5 + $0x60] sm:$0xff]
        %v337 = vld [vmem:[#allocation5 + $0x68] sm:$0xff]
        %v338 = vld [vmem:[#allocation5 + $0x70] sm:$0xff]
        %v339 = vld [vmem:[#allocation5 + $0x78] sm:$0xff]
        %v340 = vld [vmem:[#allocation7] sm:$0x3]
        %v341 = vld [vmem:[%s276] sm:$0xff]
        %v342 = vld [vmem:[%s276 + $0x8] sm:$0xff]
        %v343 = vld [vmem:[%s276 + $0x10] sm:$0xff]
        %v344 = vld [vmem:[%s276 + $0x18] sm:$0xff]
        %v345 = vld [vmem:[%s276 + $0x20] sm:$0xff]
        %v346 = vld [vmem:[%s276 + $0x28] sm:$0xff]
        %v347 = vunpack.c.l.bf16 %v341
        %v348 = vunpack.c.h.bf16 %v341
        %v349 = vunpack.c.l.bf16 %v342
        %v350 = vunpack.c.h.bf16 %v342
        %v351 = vunpack.c.l.bf16 %v343
        %v352 = vunpack.c.h.bf16 %v343
        %v353 = vunpack.c.l.bf16 %v344
        %v354 = vunpack.c.h.bf16 %v344
        %v355 = vunpack.c.l.bf16 %v345
        %v356 = vunpack.c.h.bf16 %v345
        %v357 = vunpack.c.l.bf16 %v346
        %v358 = vunpack.c.h.bf16 %v346
        %v360 = vperm.slane %v340, 0
        %v361 = vperm.slane %v340, 1
        %v370 = vunpack.c.l.b16 %v318
        %v371 = vunpack.c.l.b16 %v319
        %v372 = vunpack.c.l.b16 %v320
        %v373 = vunpack.c.l.b16 %v321
        %v374 = vunpack.c.l.b16 %v322
        %v375 = vunpack.c.l.b16 %v323
        %v376 = vpack.c.b16 %v371, %v370
        %v377 = vpack.c.b16 %v373, %v372
        %v378 = vpack.c.b16 %v375, %v374
        %v398 = vunpack.c.l.b16 %v324
        %v399 = vunpack.c.h.b16 %v324
        %v400 = vunpack.c.l.b16 %v325
        %v401 = vunpack.c.h.b16 %v325
        %v402 = vunpack.c.l.b16 %v326
        %v403 = vunpack.c.h.b16 %v326
        %v404 = vunpack.c.l.b16 %v327
        %v405 = vunpack.c.h.b16 %v327
        %v406 = vunpack.c.l.b16 %v328
        %v407 = vunpack.c.h.b16 %v328
        %v408 = vunpack.c.l.b16 %v329
        %v409 = vunpack.c.h.b16 %v329
        %v410 = vunpack.c.l.b16 %v330
        %v411 = vunpack.c.h.b16 %v330
        %v412 = vunpack.c.l.b16 %v331
        %v413 = vunpack.c.h.b16 %v331
        %v414 = vunpack.c.l.b16 %v332
        %v415 = vunpack.c.h.b16 %v332
        %v416 = vunpack.c.l.b16 %v333
        %v417 = vunpack.c.h.b16 %v333
        %v418 = vunpack.c.l.b16 %v334
        %v419 = vunpack.c.h.b16 %v334
        %v420 = vunpack.c.l.b16 %v335
        %v421 = vunpack.c.h.b16 %v335
        %v422 = vunpack.c.l.b16 %v336
        %v423 = vunpack.c.h.b16 %v336
        %v424 = vunpack.c.l.b16 %v337
        %v425 = vunpack.c.h.b16 %v337
        %v426 = vunpack.c.l.b16 %v338
        %v427 = vunpack.c.h.b16 %v338
        %v428 = vunpack.c.l.b16 %v339
        %v429 = vunpack.c.h.b16 %v339
        %v430 = vpack.c.b16 %v400, %v398
        %v431 = vpack.c.b16 %v401, %v399
        %v432 = vpack.c.b16 %v404, %v402
        %v433 = vpack.c.b16 %v405, %v403
        %v434 = vpack.c.b16 %v408, %v406
        %v435 = vpack.c.b16 %v409, %v407
        %v436 = vpack.c.b16 %v412, %v410
        %v437 = vpack.c.b16 %v413, %v411
        %v438 = vpack.c.b16 %v416, %v414
        %v439 = vpack.c.b16 %v417, %v415
        %v440 = vpack.c.b16 %v420, %v418
        %v441 = vpack.c.b16 %v421, %v419
        %v442 = vpack.c.b16 %v424, %v422
        %v443 = vpack.c.b16 %v425, %v423
        %v444 = vpack.c.b16 %v428, %v426
        %v445 = vpack.c.b16 %v429, %v427
        %462 = vmatpush.bf16.msra.mxu0 %v444
        %463 = vmatpush.bf16.msra.mxu0 %v442
        %464 = vmatpush.bf16.msra.mxu0 %v440
        %465 = vmatpush.bf16.msra.mxu0 %v438
        %466 = vmatpush.bf16.msra.mxu0 %v436
        %467 = vmatpush.bf16.msra.mxu0 %v434
        %468 = vmatpush.bf16.msra.mxu0 %v432
        %469 = vmatpush.bf16.msra.mxu0 %v430
        %470 = vmatmul.bf16.gmra.mxu0 %v376
        %v471 = vpop.f32.mrf.mxu0
        %v472 = vadd.f32 %v360, %v471
        %v473 = vpop.f32.mrf.mxu0
        %v474 = vadd.f32 %v360, %v473
        %475 = vmatmul.bf16.gmra.mxu0 %v377
        %v476 = vpop.f32.mrf.mxu0
        %v477 = vadd.f32 %v360, %v476
        %v478 = vpop.f32.mrf.mxu0
        %v479 = vadd.f32 %v360, %v478
        %480 = vmatmul.bf16.gmra.mxu0 %v378
        %v481 = vpop.f32.mrf.mxu0
        %v482 = vadd.f32 %v360, %v481
        %v483 = vpop.f32.mrf.mxu0
        %v484 = vadd.f32 %v360, %v483
        %485 = vdwg.mxu0
        %486 = vmatpush.bf16.msra.mxu0 %v445
        %487 = vmatpush.bf16.msra.mxu0 %v443
        %488 = vmatpush.bf16.msra.mxu0 %v441
        %489 = vmatpush.bf16.msra.mxu0 %v439
        %490 = vmatpush.bf16.msra.mxu0 %v437
        %491 = vmatpush.bf16.msra.mxu0 %v435
        %492 = vmatpush.bf16.msra.mxu0 %v433
        %493 = vmatpush.bf16.msra.mxu0 %v431
        %494 = vmatmul.bf16.gmra.mxu0 %v376
        %v495 = vpop.f32.mrf.mxu0
        %v496 = vadd.f32 %v361, %v495
        %v497 = vpop.f32.mrf.mxu0
        %v498 = vadd.f32 %v361, %v497
        %499 = vmatmul.bf16.gmra.mxu0 %v377
        %v500 = vpop.f32.mrf.mxu0
        %v501 = vadd.f32 %v361, %v500
        %v502 = vpop.f32.mrf.mxu0
        %v503 = vadd.f32 %v361, %v502
        %504 = vmatmul.bf16.gmra.mxu0 %v378
        %v505 = vpop.f32.mrf.mxu0
        %v506 = vadd.f32 %v361, %v505
        %v507 = vpop.f32.mrf.mxu0
        %v508 = vadd.f32 %v361, %v507
        %509 = vdwg.mxu0
        %v510 = vadd.f32 %v347, %v348
        %511 = vadd.xlane.f32.xlu0 %v510
        %v512 = vpop.xlane.xlu0 %511
        %v513 = vadd.f32 %v349, %v350
        %514 = vadd.xlane.f32.xlu0 %v513
        %v515 = vpop.xlane.xlu0 %514
        %v516 = vadd.f32 %v351, %v352
        %517 = vadd.xlane.f32.xlu0 %v516
        %v518 = vpop.xlane.xlu0 %517
        %v519 = vadd.f32 %v353, %v354
        %520 = vadd.xlane.f32.xlu0 %v519
        %v521 = vpop.xlane.xlu0 %520
        %v522 = vadd.f32 %v355, %v356
        %523 = vadd.xlane.f32.xlu0 %v522
        %v524 = vpop.xlane.xlu0 %523
        %v525 = vadd.f32 %v357, %v358
        %526 = vadd.xlane.f32.xlu0 %v525
        %v527 = vpop.xlane.xlu0 %526
        %v528 = vrcp.pop 256.0
        %v529 = vmul.f32 256.0, %v528
        %v530 = vsub.f32 1.0, %v529
        %v531 = vmul.f32 %v528, %v530
        %v532 = vadd.f32 %v528, %v531
        %vm533 = vweird.f32 %v528
        %v534 = vsel %vm533, %v528, %v532
        %v535 = vmul.f32 %v512, %v534
        %v536 = vmul.f32 %v515, %v534
        %v537 = vmul.f32 %v518, %v534
        %v538 = vmul.f32 %v521, %v534
        %v539 = vmul.f32 %v524, %v534
        %v540 = vmul.f32 %v527, %v534
        %v541 = vsub.f32 %v347, %v535
        %v542 = vsub.f32 %v348, %v535
        %v543 = vsub.f32 %v349, %v536
        %v544 = vsub.f32 %v350, %v536
        %v545 = vsub.f32 %v351, %v537
        %v546 = vsub.f32 %v352, %v537
        %v547 = vsub.f32 %v353, %v538
        %v548 = vsub.f32 %v354, %v538
        %v549 = vsub.f32 %v355, %v539
        %v550 = vsub.f32 %v356, %v539
        %v551 = vsub.f32 %v357, %v540
        %v552 = vsub.f32 %v358, %v540
        %v553 = vmul.f32 %v541, %v541
        %v554 = vmul.f32 %v542, %v542
        %v555 = vmul.f32 %v543, %v543
        %v556 = vmul.f32 %v544, %v544
        %v557 = vmul.f32 %v545, %v545
        %v558 = vmul.f32 %v546, %v546
        %v559 = vmul.f32 %v547, %v547
        %v560 = vmul.f32 %v548, %v548
        %v561 = vmul.f32 %v549, %v549
        %v562 = vmul.f32 %v550, %v550
        %v563 = vmul.f32 %v551, %v551
        %v564 = vmul.f32 %v552, %v552
        %v565 = vadd.f32 %v553, %v554
        %566 = vadd.xlane.f32.xlu0 %v565
        %v567 = vpop.xlane.xlu0 %566
        %v568 = vadd.f32 %v555, %v556
        %569 = vadd.xlane.f32.xlu0 %v568
        %v570 = vpop.xlane.xlu0 %569
        %v571 = vadd.f32 %v557, %v558
        %572 = vadd.xlane.f32.xlu0 %v571
        %v573 = vpop.xlane.xlu0 %572
        %v574 = vadd.f32 %v559, %v560
        %575 = vadd.xlane.f32.xlu0 %v574
        %v576 = vpop.xlane.xlu0 %575
        %v577 = vadd.f32 %v561, %v562
        %578 = vadd.xlane.f32.xlu0 %v577
        %v579 = vpop.xlane.xlu0 %578
        %v580 = vadd.f32 %v563, %v564
        %581 = vadd.xlane.f32.xlu0 %v580
        %v582 = vpop.xlane.xlu0 %581
        %v583 = vmul.f32 %v567, %v534
        %v584 = vmul.f32 %v570, %v534
        %v585 = vmul.f32 %v573, %v534
        %v586 = vmul.f32 %v576, %v534
        %v587 = vmul.f32 %v579, %v534
        %v588 = vmul.f32 %v582, %v534
        %v589 = vadd.f32 %v583, 1e-05
        %v590 = vadd.f32 %v584, 1e-05
        %v591 = vadd.f32 %v585, 1e-05
        %v592 = vadd.f32 %v586, 1e-05
        %v593 = vadd.f32 %v587, 1e-05
        %v594 = vadd.f32 %v588, 1e-05
        %v595 = vrsqrt.pop %v589
        %v596 = vmul.f32 %v595, %v589
        %v597 = vmul.f32 %v596, %v595
        %v598 = vmul.f32 0.5, %v597
        %v599 = vsub.f32 1.5, %v598
        %v600 = vmul.f32 %v595, %v599
        %vm601 = vweird.f32 %v589
        %vm602 = vweird.f32 %v595
        %vm603 = vmor %vm601, %vm602
        %v604 = vsel %vm603, %v595, %v600
        %v605 = vrsqrt.pop %v590
        %v606 = vmul.f32 %v605, %v590
        %v607 = vmul.f32 %v606, %v605
        %v608 = vmul.f32 0.5, %v607
        %v609 = vsub.f32 1.5, %v608
        %v610 = vmul.f32 %v605, %v609
        %vm611 = vweird.f32 %v590
        %vm612 = vweird.f32 %v605
        %vm613 = vmor %vm611, %vm612
        %v614 = vsel %vm613, %v605, %v610
        %v615 = vrsqrt.pop %v591
        %v616 = vmul.f32 %v615, %v591
        %v617 = vmul.f32 %v616, %v615
        %v618 = vmul.f32 0.5, %v617
        %v619 = vsub.f32 1.5, %v618
        %v620 = vmul.f32 %v615, %v619
        %vm621 = vweird.f32 %v591
        %vm622 = vweird.f32 %v615
        %vm623 = vmor %vm621, %vm622
        %v624 = vsel %vm623, %v615, %v620
        %v625 = vrsqrt.pop %v592
        %v626 = vmul.f32 %v625, %v592
        %v627 = vmul.f32 %v626, %v625
        %v628 = vmul.f32 0.5, %v627
        %v629 = vsub.f32 1.5, %v628
        %v630 = vmul.f32 %v625, %v629
        %vm631 = vweird.f32 %v592
        %vm632 = vweird.f32 %v625
        %vm633 = vmor %vm631, %vm632
        %v634 = vsel %vm633, %v625, %v630
        %v635 = vrsqrt.pop %v593
        %v636 = vmul.f32 %v635, %v593
        %v637 = vmul.f32 %v636, %v635
        %v638 = vmul.f32 0.5, %v637
        %v639 = vsub.f32 1.5, %v638
        %v640 = vmul.f32 %v635, %v639
        %vm641 = vweird.f32 %v593
        %vm642 = vweird.f32 %v635
        %vm643 = vmor %vm641, %vm642
        %v644 = vsel %vm643, %v635, %v640
        %v645 = vrsqrt.pop %v594
        %v646 = vmul.f32 %v645, %v594
        %v647 = vmul.f32 %v646, %v645
        %v648 = vmul.f32 0.5, %v647
        %v649 = vsub.f32 1.5, %v648
        %v650 = vmul.f32 %v645, %v649
        %vm651 = vweird.f32 %v594
        %vm652 = vweird.f32 %v645
        %vm653 = vmor %vm651, %vm652
        %v654 = vsel %vm653, %v645, %v650
        %v655 = vmul.f32 %v541, %v604
        %v656 = vmul.f32 %v542, %v604
        %v657 = vmul.f32 %v543, %v614
        %v658 = vmul.f32 %v544, %v614
        %v659 = vmul.f32 %v545, %v624
        %v660 = vmul.f32 %v546, %v624
        %v661 = vmul.f32 %v547, %v634
        %v662 = vmul.f32 %v548, %v634
        %v663 = vmul.f32 %v549, %v644
        %v664 = vmul.f32 %v550, %v644
        %v665 = vmul.f32 %v551, %v654
        %v666 = vmul.f32 %v552, %v654
        %v667 = vsub.f32 %v472, %v655
        %v668 = vsub.f32 %v496, %v656
        %v669 = vsub.f32 %v474, %v657
        %v670 = vsub.f32 %v498, %v658
        %v671 = vsub.f32 %v477, %v659
        %v672 = vsub.f32 %v501, %v660
        %v673 = vsub.f32 %v479, %v661
        %v674 = vsub.f32 %v503, %v662
        %v675 = vsub.f32 %v482, %v663
        %v676 = vsub.f32 %v506, %v664
        %v677 = vsub.f32 %v484, %v665
        %v678 = vsub.f32 %v508, %v666
        %v679 = vand.u32 2147483647, %v667
        %v680 = vand.u32 2147483647, %v668
        %v681 = vand.u32 2147483647, %v669
        %v682 = vand.u32 2147483647, %v670
        %v683 = vand.u32 2147483647, %v671
        %v684 = vand.u32 2147483647, %v672
        %v685 = vand.u32 2147483647, %v673
        %v686 = vand.u32 2147483647, %v674
        %v687 = vand.u32 2147483647, %v675
        %v688 = vand.u32 2147483647, %v676
        %v689 = vand.u32 2147483647, %v677
        %v690 = vand.u32 2147483647, %v678
        %vm691 = vcmp.lt.f32.partialorder %v679, 2.0
        %vm692 = vcmp.lt.f32.partialorder %v680, 2.0
        %vm693 = vcmp.lt.f32.partialorder %v681, 2.0
        %vm694 = vcmp.lt.f32.partialorder %v682, 2.0
        %vm695 = vcmp.lt.f32.partialorder %v683, 2.0
        %vm696 = vcmp.lt.f32.partialorder %v684, 2.0
        %vm697 = vcmp.lt.f32.partialorder %v685, 2.0
        %vm698 = vcmp.lt.f32.partialorder %v686, 2.0
        %vm699 = vcmp.lt.f32.partialorder %v687, 2.0
        %vm700 = vcmp.lt.f32.partialorder %v688, 2.0
        %vm701 = vcmp.lt.f32.partialorder %v689, 2.0
        %vm702 = vcmp.lt.f32.partialorder %v690, 2.0
        %v703 = vmul.f32 %v667, 0.25
        %v704 = vmul.f32 %v668, 0.25
        %v705 = vmul.f32 %v669, 0.25
        %v706 = vmul.f32 %v670, 0.25
        %v707 = vmul.f32 %v671, 0.25
        %v708 = vmul.f32 %v672, 0.25
        %v709 = vmul.f32 %v673, 0.25
        %v710 = vmul.f32 %v674, 0.25
        %v711 = vmul.f32 %v675, 0.25
        %v712 = vmul.f32 %v676, 0.25
        %v713 = vmul.f32 %v677, 0.25
        %v714 = vmul.f32 %v678, 0.25
        %v715 = vmul.f32 %v703, %v667
        %v716 = vmul.f32 %v704, %v668
        %v717 = vmul.f32 %v705, %v669
        %v718 = vmul.f32 %v706, %v670
        %v719 = vmul.f32 %v707, %v671
        %v720 = vmul.f32 %v708, %v672
        %v721 = vmul.f32 %v709, %v673
        %v722 = vmul.f32 %v710, %v674
        %v723 = vmul.f32 %v711, %v675
        %v724 = vmul.f32 %v712, %v676
        %v725 = vmul.f32 %v713, %v677
        %v726 = vmul.f32 %v714, %v678
        %v727 = vsub.f32 %v679, 1.0
        %v728 = vsub.f32 %v680, 1.0
        %v729 = vsub.f32 %v681, 1.0
        %v730 = vsub.f32 %v682, 1.0
        %v731 = vsub.f32 %v683, 1.0
        %v732 = vsub.f32 %v684, 1.0
        %v733 = vsub.f32 %v685, 1.0
        %v734 = vsub.f32 %v686, 1.0
        %v735 = vsub.f32 %v687, 1.0
        %v736 = vsub.f32 %v688, 1.0
        %v737 = vsub.f32 %v689, 1.0
        %v738 = vsub.f32 %v690, 1.0
        %v739 = vsel %vm691, %v715, %v727
        %v740 = vsel %vm692, %v716, %v728
        %v741 = vsel %vm693, %v717, %v729
        %v742 = vsel %vm694, %v718, %v730
        %v743 = vsel %vm695, %v719, %v731
        %v744 = vsel %vm696, %v720, %v732
        %v745 = vsel %vm697, %v721, %v733
        %v746 = vsel %vm698, %v722, %v734
        %v747 = vsel %vm699, %v723, %v735
        %v748 = vsel %vm700, %v724, %v736
        %v749 = vsel %vm701, %v725, %v737
        %v750 = vsel %vm702, %v726, %v738
        %p751 = scmp.ne.s32.totalorder %s25, 2
        // Predicated region
        $region53: #{tpu_custom_call.1} parent=35 // pred_check
          %p752 = pneg %p751
        $region54: #{tpu_custom_call.1} parent=35 // pred_check_branch
          %754 = sbr.rel (%p752) target = $region56
        $region55: #{tpu_custom_call.1} parent=35 // pred_region
          %v755 = vadd.f32 %v739, %v740
          %v756 = vadd.f32 %v755, %v741
          %v757 = vadd.f32 %v756, %v742
          %v758 = vadd.f32 %v757, %v743
          %v759 = vadd.f32 %v758, %v744
          %v760 = vadd.f32 %v759, %v745
          %v761 = vadd.f32 %v760, %v746
          %v762 = vadd.f32 %v761, %v747
          %v763 = vadd.f32 %v762, %v748
          %v764 = vadd.f32 %v763, %v749
          %v765 = vadd.f32 %v764, %v750
          %766 = vadd.xlane.f32.xlu0 %v765
          %v767 = vpop.xlane.xlu0 %766
          %v768 = vrot.slane %v767, 4
          %v769 = vadd.f32 %v767, %v768
          %v770 = vrot.slane %v769, 2
          %v771 = vadd.f32 %v769, %v770
          %v772 = vrot.slane %v771, 1
          %v773 = vadd.f32 %v771, %v772
          %s774 = vtos %v773
          %v775 = vstv %s774
          %776 = vst [vmem:[%s306] sm:$0xff] %v775
        $region56: #{tpu_custom_call.1} parent=35 // pred_fallthru
          _
        %p777 = scmp.eq.s32.totalorder %s25, 2
        // Predicated region
        $region57: #{tpu_custom_call.1} parent=35 // pred_check
          %p778 = pneg %p777
        $region58: #{tpu_custom_call.1} parent=35 // pred_check_branch
          %780 = sbr.rel (%p778) target = $region60
        $region59: #{tpu_custom_call.1} parent=35 // pred_region
          %s781 = smul.u32 %s25, 48
          %v782 = vlaneseq
          %v783 = vshrl.u32 %v782, 7
          %v784 = vadd.s32 %v783, 8
          %v785 = vadd.s32 %v783, 16
          %v786 = vadd.s32 %v783, 24
          %v787 = vadd.s32 %v783, 32
          %v788 = vadd.s32 %v783, 40
          %v789 = vstv %s781
          %v790 = vadd.s32 %v789, %v783
          %v791 = vadd.s32 %v789, %v784
          %v792 = vadd.s32 %v789, %v785
          %v793 = vadd.s32 %v789, %v786
          %v794 = vadd.s32 %v789, %v787
          %v795 = vadd.s32 %v789, %v788
          %vm796 = vcmp.lt.s32.totalorder %v790, 128
          %vm797 = vcmp.lt.s32.totalorder %v791, 128
          %vm798 = vcmp.lt.s32.totalorder %v792, 128
          %vm799 = vcmp.lt.s32.totalorder %v793, 128
          %vm800 = vcmp.lt.s32.totalorder %v794, 128
          %vm801 = vcmp.lt.s32.totalorder %v795, 128
          %v802 = vsel %vm796, %v739, 0.0
          %v803 = vsel %vm796, %v740, 0.0
          %v804 = vsel %vm797, %v741, 0.0
          %v805 = vsel %vm797, %v742, 0.0
          %v806 = vsel %vm798, %v743, 0.0
          %v807 = vsel %vm798, %v744, 0.0
          %v808 = vsel %vm799, %v745, 0.0
          %v809 = vsel %vm799, %v746, 0.0
          %v810 = vsel %vm800, %v747, 0.0
          %v811 = vsel %vm800, %v748, 0.0
          %v812 = vsel %vm801, %v749, 0.0
          %v813 = vsel %vm801, %v750, 0.0
          %v814 = vadd.f32 %v802, %v803
          %v815 = vadd.f32 %v814, %v804
          %v816 = vadd.f32 %v815, %v805
          %v817 = vadd.f32 %v816, %v806
          %v818 = vadd.f32 %v817, %v807
          %v819 = vadd.f32 %v818, %v808
          %v820 = vadd.f32 %v819, %v809
          %v821 = vadd.f32 %v820, %v810
          %v822 = vadd.f32 %v821, %v811
          %v823 = vadd.f32 %v822, %v812
          %v824 = vadd.f32 %v823, %v813
          %825 = vadd.xlane.f32.xlu0 %v824
          %v826 = vpop.xlane.xlu0 %825
          %v827 = vrot.slane %v826, 4
          %v828 = vadd.f32 %v826, %v827
          %v829 = vrot.slane %v828, 2
          %v830 = vadd.f32 %v828, %v829
          %v831 = vrot.slane %v830, 1
          %v832 = vadd.f32 %v830, %v831
          %s833 = vtos %v832
          %v834 = vstv %s833
          %835 = vst [vmem:[%s306] sm:$0xff] %v834
        $region60: #{tpu_custom_call.1} parent=35 // pred_fallthru
          _
        %s836 = sand.u32 %s127, 1
        %s837 = scalar_lea.sflag [#allocation4], %s836
        %s838 = sand.u32 %s127, 1
        %s839 = smul.addr %s838, 8
        %s840 = scalar_lea.vmem [#allocation10], %s839
        // Predicated region
        $region61: #{tpu_custom_call.1} parent=35 // pred_check
          %p841 = pneg %p137
        $region62: #{tpu_custom_call.1} parent=35 // pred_check_branch
          %843 = sbr.rel (%p841) target = $region64
        $region63: #{tpu_custom_call.1} parent=35 // pred_region
          %845 = vsyncadd %s837, 0
          %s846 = smul.addr %s25, 8
          %s847 = scalar_lea.hbm %s4, %s846
          %s849 = sshll.u32 %s840, 4
          %s850 = int_to_ptr.vmem [resolvable:$true] %s849
          %s851 = sshll.u32 %s847, 4
          %s852 = int_to_ptr.hbm [resolvable:$true] %s851
          %854 = dma.vmem_to_hbm [thread:$0]  %s850, 128, %s852, %s837
        $region64: #{tpu_custom_call.1} parent=35 // pred_fallthru
          _
      $region36: #{tpu_custom_call.1} parent=5 // pred_fallthru
        _
      %p855 = scmp.le.s32.totalorder 2, %s20
      // Predicated region
      $region65: #{tpu_custom_call.1} parent=5 // pred_check
        %p856 = pneg %p855
      $region66: #{tpu_custom_call.1} parent=5 // pred_check_branch
        %858 = sbr.rel (%p856) target = $region68
      $region67: #{tpu_custom_call.1} parent=5 // pred_region
        %s859 = ssub.s32 %s20, 2
        // Predicated region
        $region69: #{tpu_custom_call.1} parent=67 // pred_check
          %p860 = pneg %p143
        $region70: #{tpu_custom_call.1} parent=67 // pred_check_branch
          %862 = sbr.rel (%p860) target = $region72
        $region71: #{tpu_custom_call.1} parent=67 // pred_region
          %s863 = sand.u32 %s128, 1
          %s864 = scalar_lea.sflag [#allocation4], %s863
          %s865 = sand.u32 %s128, 1
          %s866 = smul.addr %s865, 8
          %s867 = scalar_lea.vmem [#allocation10], %s866
          %869 = dma.done %s864, 128
        $region72: #{tpu_custom_call.1} parent=67 // pred_fallthru
          _
      $region68: #{tpu_custom_call.1} parent=5 // pred_fallthru
        _
    $region6: #{tpu_custom_call.1} parent=1 // loop_footer
      %s24 = sadd.s32 1, %s20
    $region7: #{tpu_custom_call.1} parent=1 // loop_footer_branch
      %19 = sbr.rel target = $region3
    $region8: #{tpu_custom_call.1} parent=1 // loop_exit
      _
    %870 = vsyncpa [#allocation3], 1
    %s871 = scalar_lea.sflag [#allocation3], 1
    %872 = vsyncpa %s871, 1
    %873 = vsyncpa [#allocation6], 1
    %874 = vsyncpa [#allocation9], 1
    %s875 = scalar_lea.sflag [#allocation9], 1
    %876 = vsyncpa %s875, 1
    %877 = vsyncpa [#allocation4], 1
    %s878 = scalar_lea.sflag [#allocation4], 1
    %879 = vsyncpa %s878, 1

// kernel: tpu_custom_call.1
$region0: #{tpu_custom_call.1}
  #allocation0 [shape = 'u32[]', space=smem, size = 0x4, offset = 0x4, fixed_abs, tag = 'smem constant byte address 0x4 - core index']
  #allocation1 [shape = 'u32[72,128]{1,0:T(1,128)}', space=vmem, size = 0x9000, scoped, tag = 'internal scratch']
  %s0 = inlined_call_operand.hbm [shape: bf16[128,128], index: 0, kind: input, shape index: {}]
  %s1 = inlined_call_operand.hbm [shape: bf16[128,256], index: 1, kind: input, shape index: {}]
  %s2 = inlined_call_operand.hbm [shape: f32[1,256], index: 2, kind: input, shape index: {}]
  %s3 = inlined_call_operand.hbm [shape: bf16[128,256], index: 3, kind: input, shape index: {}]
  %s4 = inlined_call_operand.hbm [shape: f32[3,8,128], index: 4, kind: output, shape index: {}]
  %s5 = sld [smem:[#allocation0]]
  $region73: #{tpu_custom_call.1} parent=0
    _
  %s7 = ssub.s32 1, %s5
  %s8 = scalar_select 0, %s7, %s5
  $region1: #{tpu_custom_call.1} parent=0
    #allocation2 [shape = 'u8[24576]{0}', space=vmem, size = 0x6000, scoped, tag = 'input window, operand 0']
    #allocation3 [shape = 's32[2]{0}', space=sflag, size = 0x8, scoped, tag = 'scoped memory for tpu_custom_call.1']
    #allocation4 [shape = 's32[2]{0}', space=sflag, size = 0x8, scoped, tag = 'scoped memory for tpu_custom_call.1']
    #allocation5 [shape = 'u8[65536]{0}', space=vmem, size = 0x10000, scoped, tag = 'input window, operand 1, single buffered']
    #allocation6 [shape = 's32[1]{0}', space=sflag, size = 0x4, scoped, tag = 'scoped memory for tpu_custom_call.1']
    #allocation7 [shape = 'u8[1024]{0}', space=vmem, size = 0x400, scoped, tag = 'input window, operand 2, single buffered']
    #allocation8 [shape = 'u8[49152]{0}', space=vmem, size = 0xc000, scoped, tag = 'input window, operand 3']
    #allocation9 [shape = 's32[2]{0}', space=sflag, size = 0x8, scoped, tag = 'scoped memory for tpu_custom_call.1']
    #allocation10 [shape = 'u8[8192]{0}', space=vmem, size = 0x2000, scoped, tag = 'output window, operand 0']
    %9 = vsyncpa [#allocation3], 0
    %s10 = scalar_lea.sflag [#allocation3], 1
    %11 = vsyncpa %s10, 0
    %12 = vsyncpa [#allocation6], 0
    %13 = vsyncpa [#allocation9], 0
    %s14 = scalar_lea.sflag [#allocation9], 1
    %15 = vsyncpa %s14, 0
    %16 = vsyncpa [#allocation4], 0
    %s17 = scalar_lea.sflag [#allocation4], 1
    %18 = vsyncpa %s17, 0
    loop: start=0, step=1, limit=5
    $region2: #{tpu_custom_call.1} parent=1 // loop_pre_header
      _
    $region3: #{tpu_custom_call.1} parent=1 // loop_header
      %s20 = sphi 0, %s24
      %p21 = scmp.ge.s32.totalorder %s20, 5
      %s30 = sphi 0, %s32
      %s33 = sphi 0, %s30
      %s34 = sphi 0, %s33
      %s50 = sphi 0, %s34
      %s54 = sphi 0, %s54
      %s56 = sphi 0, %s54
      %s57 = sphi 0, %s56
      %s71 = sphi 0, %s57
      %s75 = sphi 0, %s75
      %s77 = sphi 0, %s75
      %s78 = sphi 0, %s77
      %s92 = sphi 0, %s78
      %s98 = sphi 0, %s100
      %s101 = sphi 0, %s98
      %s102 = sphi 0, %s101
      %s118 = sphi 0, %s102
      %s124 = sphi 0, %s126
      %s127 = sphi 0, %s124
      %s128 = sphi 0, %s127
      %s144 = sphi 0, %s128
    $region4: #{tpu_custom_call.1} parent=1 // loop_header_branch
      %23 = sbr.rel (%p21) target = $region8
    $region5: #{tpu_custom_call.1} parent=1 // loop_body
      %s25 = ssub.s32 %s20, 1
      %s26 = ssub.s32 %s20, 2
      %s27 = sadd.s32 %s20, 1
      %s28 = ssub.s32 %s20, %s27
      %p29 = scmp.eq.s32.totalorder %s28, 0
      %s31 = sadd.s32 %s30, 1
      %s32 = scalar_select %p29, %s30, %s31
      %p35 = pneg %p29
      %p36 = scmp.eq.s32.totalorder %s20, 2
      %p37 = por %p35, %p36
      %p38 = scmp.ne.s32.totalorder %s30, %s33
      %p39 = scmp.eq.s32.totalorder %s20, 0
      %p40 = por %p38, %p39
      %p41 = scmp.ne.s32.totalorder %s30, %s33
      %p42 = scmp.eq.s32.totalorder %s25, 2
      %p43 = por %p41, %p42
      %p44 = scmp.ne.s32.totalorder %s33, %s34
      %p45 = scmp.eq.s32.totalorder %s25, 0
      %p46 = por %p44, %p45
      %p47 = scmp.ne.s32.totalorder %s33, %s34
      %p48 = scmp.eq.s32.totalorder %s26, 2
      %p49 = por %p47, %p48
      %p51 = scmp.ne.s32.totalorder %s34, %s50
      %p52 = scmp.eq.s32.totalorder %s26, 0
      %p53 = por %p51, %p52
      %s55 = sadd.s32 %s54, 1
      %p58 = scmp.eq.s32.totalorder %s20, 2
      %p59 = scmp.ne.s32.totalorder %s54, %s56
      %p60 = scmp.eq.s32.totalorder %s20, 0
      %p61 = por %p59, %p60
      %p62 = scmp.ne.s32.totalorder %s54, %s56
      %p63 = scmp.eq.s32.totalorder %s25, 2
      %p64 = por %p62, %p63
      %p65 = scmp.ne.s32.totalorder %s56, %s57
      %p66 = scmp.eq.s32.totalorder %s25, 0
      %p67 = por %p65, %p66
      %p68 = scmp.ne.s32.totalorder %s56, %s57
      %p69 = scmp.eq.s32.totalorder %s26, 2
      %p70 = por %p68, %p69
      %p72 = scmp.ne.s32.totalorder %s57, %s71
      %p73 = scmp.eq.s32.totalorder %s26, 0
      %p74 = por %p72, %p73
      %s76 = sadd.s32 %s75, 1
      %p79 = scmp.eq.s32.totalorder %s20, 2
      %p80 = scmp.ne.s32.totalorder %s75, %s77
      %p81 = scmp.eq.s32.totalorder %s20, 0
      %p82 = por %p80, %p81
      %p83 = scmp.ne.s32.totalorder %s75, %s77
      %p84 = scmp.eq.s32.totalorder %s25, 2
      %p85 = por %p83, %p84
      %p86 = scmp.ne.s32.totalorder %s77, %s78
      %p87 = scmp.eq.s32.totalorder %s25, 0
      %p88 = por %p86, %p87
      %p89 = scmp.ne.s32.totalorder %s77, %s78
      %p90 = scmp.eq.s32.totalorder %s26, 2
      %p91 = por %p89, %p90
      %p93 = scmp.ne.s32.totalorder %s78, %s92
      %p94 = scmp.eq.s32.totalorder %s26, 0
      %p95 = por %p93, %p94
      %s96 = ssub.s32 %s20, %s27
      %p97 = scmp.eq.s32.totalorder %s96, 0
      %s99 = sadd.s32 %s98, 1
      %s100 = scalar_select %p97, %s98, %s99
      %p103 = pneg %p97
      %p104 = scmp.eq.s32.totalorder %s20, 2
      %p105 = por %p103, %p104
      %p106 = scmp.ne.s32.totalorder %s98, %s101
      %p107 = scmp.eq.s32.totalorder %s20, 0
      %p108 = por %p106, %p107
      %p109 = scmp.ne.s32.totalorder %s98, %s101
      %p110 = scmp.eq.s32.totalorder %s25, 2
      %p111 = por %p109, %p110
      %p112 = scmp.ne.s32.totalorder %s101, %s102
      %p113 = scmp.eq.s32.totalorder %s25, 0
      %p114 = por %p112, %p113
      %p115 = scmp.ne.s32.totalorder %s101, %s102
      %p116 = scmp.eq.s32.totalorder %s26, 2
      %p117 = por %p115, %p116
      %p119 = scmp.ne.s32.totalorder %s102, %s118
      %p120 = scmp.eq.s32.totalorder %s26, 0
      %p121 = por %p119, %p120
      %s122 = ssub.s32 %s20, %s27
      %p123 = scmp.eq.s32.totalorder %s122, 0
      %s125 = sadd.s32 %s124, 1
      %s126 = scalar_select %p123, %s124, %s125
      %p129 = pneg %p123
      %p130 = scmp.eq.s32.totalorder %s20, 2
      %p131 = por %p129, %p130
      %p132 = scmp.ne.s32.totalorder %s124, %s127
      %p133 = scmp.eq.s32.totalorder %s20, 0
      %p134 = por %p132, %p133
      %p135 = scmp.ne.s32.totalorder %s124, %s127
      %p136 = scmp.eq.s32.totalorder %s25, 2
      %p137 = por %p135, %p136
      %p138 = scmp.ne.s32.totalorder %s127, %s128
      %p139 = scmp.eq.s32.totalorder %s25, 0
      %p140 = por %p138, %p139
      %p141 = scmp.ne.s32.totalorder %s127, %s128
      %p142 = scmp.eq.s32.totalorder %s26, 2
      %p143 = por %p141, %p142
      %p145 = scmp.ne.s32.totalorder %s128, %s144
      %p146 = scmp.eq.s32.totalorder %s26, 0
      %p147 = por %p145, %p146
      %p148 = scmp.le.s32.totalorder 1, %s20
      %p149 = scmp.lt.s32.totalorder %s20, 4
      %p150 = pnand %p148, %p149
      %p151 = pneg %p150
      // Predicated region
      $region9: #{tpu_custom_call.1} parent=5 // pred_check
        _
      $region10: #{tpu_custom_call.1} parent=5 // pred_check_branch
        %153 = sbr.rel (%p150) target = $region12
      $region11: #{tpu_custom_call.1} parent=5 // pred_region
        %s154 = ssub.s32 %s20, 1
        // Predicated region
        $region13: #{tpu_custom_call.1} parent=11 // pred_check
          %p155 = pneg %p67
        $region14: #{tpu_custom_call.1} parent=11 // pred_check_branch
          %157 = sbr.rel (%p155) target = $region16
        $region15: #{tpu_custom_call.1} parent=11 // pred_region
          %159 = vsyncadd [#allocation6], 0
          %s160 = sshll.u32 %s1, 4
          %s161 = int_to_ptr.hbm [resolvable:$true] %s160
          %s162 = sshll.u32 [#allocation5], 4
          %s163 = int_to_ptr.vmem [resolvable:$true] %s162
          %168 = dma.hbm_to_vmem [thread:$0]  %s161, 2048, %s163, [#allocation6], 128, 128, 8
        $region16: #{tpu_custom_call.1} parent=11 // pred_fallthru
          _
        // Predicated region
        $region17: #{tpu_custom_call.1} parent=11 // pred_check
          %p169 = pneg %p88
        $region18: #{tpu_custom_call.1} parent=11 // pred_check_branch
          %171 = sbr.rel (%p169) target = $region20
        $region19: #{tpu_custom_call.1} parent=11 // pred_region
          %173 = vsyncadd [#allocation6], 0
          %s175 = sshll.u32 %s2, 4
          %s176 = int_to_ptr.hbm [resolvable:$true] %s175
          %s177 = sshll.u32 [#allocation7], 4
          %s178 = int_to_ptr.vmem [resolvable:$true] %s177
          %180 = dma.hbm_to_vmem [thread:$0]  %s176, 32, %s178, [#allocation6]
        $region20: #{tpu_custom_call.1} parent=11 // pred_fallthru
          _
      $region12: #{tpu_custom_call.1} parent=5 // pred_fallthru
        _
      %p181 = scmp.lt.s32.totalorder %s20, 3
      // Predicated region
      $region21: #{tpu_custom_call.1} parent=5 // pred_check
        %p182 = pneg %p181
      $region22: #{tpu_custom_call.1} parent=5 // pred_check_branch
        %184 = sbr.rel (%p182) target = $region24
      $region23: #{tpu_custom_call.1} parent=5 // pred_region
        // Predicated region
        $region25: #{tpu_custom_call.1} parent=23 // pred_check
          %p185 = pneg %p40
        $region26: #{tpu_custom_call.1} parent=23 // pred_check_branch
          %187 = sbr.rel (%p185) target = $region28
        $region27: #{tpu_custom_call.1} parent=23 // pred_region
          %s188 = sand.u32 %s30, 1
          %s189 = scalar_lea.sflag [#allocation3], %s188
          %s190 = sand.u32 %s30, 1
          %s191 = smul.addr %s190, 24
          %s192 = scalar_lea.vmem [#allocation2], %s191
          %s193 = smul.u32 6, %s20
          %s194 = ssub.s32 16, %s193
          %p195 = scmp.lt.s32.totalorder %s194, 6
          %s196 = scalar_select %p195, %s194, 6
          %s197 = smul.u32 4, %s196
          %s198 = ssub.s32 24, %s197
          %s199 = sshll.u32 %s198, 4
          %200 = vsyncadd %s189, %s199
          %p201 = scmp.ne.s32.totalorder 0, %s197
          %s202 = smul.addr %s193, 4
          %s203 = scalar_lea.hbm %s0, %s202
          %s204 = smul.u32 4, %s196
          %s205 = sshll.u32 %s203, 4
          %s206 = int_to_ptr.hbm [resolvable:$true] %s205
          %s207 = sshll.u32 %s192, 4
          %s208 = int_to_ptr.vmem [resolvable:$true] %s207
          %s209 = sshll.u32 %s204, 4
          %213 = dma.hbm_to_vmem [thread:$0]  (%p201), %s206, %s209, %s208, %s189, 64, 64, 4
        $region28: #{tpu_custom_call.1} parent=23 // pred_fallthru
          _
        // Predicated region
        $region29: #{tpu_custom_call.1} parent=23 // pred_check
          %p214 = pneg %p108
        $region30: #{tpu_custom_call.1} parent=23 // pred_check_branch
          %216 = sbr.rel (%p214) target = $region32
        $region31: #{tpu_custom_call.1} parent=23 // pred_region
          %s217 = sand.u32 %s98, 1
          %s218 = scalar_lea.sflag [#allocation9], %s217
          %s219 = sand.u32 %s98, 1
          %s220 = smul.addr %s219, 48
          %s221 = scalar_lea.vmem [#allocation8], %s220
          %s222 = smul.u32 6, %s20
          %s223 = ssub.s32 16, %s222
          %p224 = scmp.lt.s32.totalorder %s223, 6
          %s225 = scalar_select %p224, %s223, 6
          %s226 = smul.u32 4, %s225
          %s227 = smul.u32 %s226, 2
          %s228 = ssub.s32 48, %s227
          %s229 = sshll.u32 %s228, 4
          %230 = vsyncadd %s218, %s229
          %p231 = scmp.ne.s32.totalorder 0, %s227
          %s232 = smul.addr %s222, 2
          %s233 = smul.addr %s232, 4
          %s234 = scalar_lea.hbm %s3, %s233
          %s235 = smul.u32 8, %s225
          %s236 = sshll.u32 %s234, 4
          %s237 = int_to_ptr.hbm [resolvable:$true] %s236
          %s238 = sshll.u32 %s221, 4
          %s239 = int_to_ptr.vmem [resolvable:$true] %s238
          %s240 = sshll.u32 %s235, 4
          %244 = dma.hbm_to_vmem [thread:$0]  (%p231), %s237, %s240, %s239, %s218, 128, 128, 8
        $region32: #{tpu_custom_call.1} parent=23 // pred_fallthru
          _
      $region24: #{tpu_custom_call.1} parent=5 // pred_fallthru
        _
      %p245 = scmp.le.s32.totalorder 1, %s20
      %p246 = scmp.lt.s32.totalorder %s20, 4
      %p247 = pnand %p245, %p246
      %p248 = pneg %p247
      // Predicated region
      $region33: #{tpu_custom_call.1} parent=5 // pred_check
        _
      $region34: #{tpu_custom_call.1} parent=5 // pred_check_branch
        %250 = sbr.rel (%p247) target = $region36
      $region35: #{tpu_custom_call.1} parent=5 // pred_region
        %s251 = ssub.s32 %s20, 1
        %s252 = sand.u32 %s33, 1
        %s253 = scalar_lea.sflag [#allocation3], %s252
        %s254 = sand.u32 %s33, 1
        %s255 = smul.addr %s254, 24
        %s256 = scalar_lea.vmem [#allocation2], %s255
        // Predicated region
        $region37: #{tpu_custom_call.1} parent=35 // pred_check
          %p257 = pneg %p46
        $region38: #{tpu_custom_call.1} parent=35 // pred_check_branch
          %259 = sbr.rel (%p257) target = $region40
        $region39: #{tpu_custom_call.1} parent=35 // pred_region
          %261 = dma.done %s253, 384
        $region40: #{tpu_custom_call.1} parent=35 // pred_fallthru
          _
        // Predicated region
        $region41: #{tpu_custom_call.1} parent=35 // pred_check
          %p262 = pneg %p67
        $region42: #{tpu_custom_call.1} parent=35 // pred_check_branch
          %264 = sbr.rel (%p262) target = $region44
        $region43: #{tpu_custom_call.1} parent=35 // pred_region
          %266 = dma.done [#allocation6], 2048
        $region44: #{tpu_custom_call.1} parent=35 // pred_fallthru
          _
        // Predicated region
        $region45: #{tpu_custom_call.1} parent=35 // pred_check
          %p267 = pneg %p88
        $region46: #{tpu_custom_call.1} parent=35 // pred_check_branch
          %269 = sbr.rel (%p267) target = $region48
        $region47: #{tpu_custom_call.1} parent=35 // pred_region
          %271 = dma.done [#allocation6], 32
        $region48: #{tpu_custom_call.1} parent=35 // pred_fallthru
          _
        %s272 = sand.u32 %s101, 1
        %s273 = scalar_lea.sflag [#allocation9], %s272
        %s274 = sand.u32 %s101, 1
        %s275 = smul.addr %s274, 48
        %s276 = scalar_lea.vmem [#allocation8], %s275
        // Predicated region
        $region49: #{tpu_custom_call.1} parent=35 // pred_check
          %p277 = pneg %p114
        $region50: #{tpu_custom_call.1} parent=35 // pred_check_branch
          %279 = sbr.rel (%p277) target = $region52
        $region51: #{tpu_custom_call.1} parent=35 // pred_region
          %281 = dma.done %s273, 768
        $region52: #{tpu_custom_call.1} parent=35 // pred_fallthru
          _
        %s282 = sand.u32 %s33, 1
        %s283 = scalar_lea.sflag [#allocation3], %s282
        %s284 = sand.u32 %s33, 1
        %s285 = smul.addr %s284, 24
        %s286 = scalar_lea.vmem [#allocation2], %s285
        %p287 = pneg %p46
        %p288 = pneg %p43
        %p289 = pneg %p67
        %p290 = pneg %p64
        %p291 = pneg %p88
        %p292 = pneg %p85
        %s293 = sand.u32 %s101, 1
        %s294 = scalar_lea.sflag [#allocation9], %s293
        %s295 = sand.u32 %s101, 1
        %s296 = smul.addr %s295, 48
        %s297 = scalar_lea.vmem [#allocation8], %s296
        %p298 = pneg %p114
        %p299 = pneg %p111
        %p300 = pneg %p140
        %p301 = pneg %p137
        %s302 = sand.u32 %s127, 1
        %s303 = scalar_lea.sflag [#allocation4], %s302
        %s304 = sand.u32 %s127, 1
        %s305 = smul.addr %s304, 8
        %s306 = scalar_lea.vmem [#allocation10], %s305
        %s307 = smul.u32 6, %s25
        %s308 = ssub.s32 16, %s307
        %p309 = scmp.lt.s32.totalorder %s308, 6
        %s310 = scalar_select %p309, %s308, 6
        %s311 = smul.u32 4, %s310
        %s312 = smul.u32 6, %s25
        %s313 = ssub.s32 16, %s312
        %p314 = scmp.lt.s32.totalorder %s313, 6
        %s315 = scalar_select %p314, %s313, 6
        %s316 = smul.u32 4, %s315
        %s317 = smul.u32 %s316, 2
        %v318 = vld [vmem:[%s256] sm:$0xf]
        %v319 = vld [vmem:[%s256 + $0x4] sm:$0xf]
        %v320 = vld [vmem:[%s256 + $0x8] sm:$0xf]
        %v321 = vld [vmem:[%s256 + $0xc] sm:$0xf]
        %v322 = vld [vmem:[%s256 + $0x10] sm:$0xf]
        %v323 = vld [vmem:[%s256 + $0x14] sm:$0xf]
        %v324 = vld [vmem:[#allocation5] sm:$0xff]
        %v325 = vld [vmem:[#allocation5 + $0x8] sm:$0xff]
        %v326 = vld [vmem:[#allocation5 + $0x10] sm:$0xff]
        %v327 = vld [vmem:[#allocation5 + $0x18] sm:$0xff]
        %v328 = vld [vmem:[#allocation5 + $0x20] sm:$0xff]
        %v329 = vld [vmem:[#allocation5 + $0x28] sm:$0xff]
        %v330 = vld [vmem:[#allocation5 + $0x30] sm:$0xff]
        %v331 = vld [vmem:[#allocation5 + $0x38] sm:$0xff]
        %v332 = vld [vmem:[#allocation5 + $0x40] sm:$0xff]
        %v333 = vld [vmem:[#allocation5 + $0x48] sm:$0xff]
        %v334 = vld [vmem:[#allocation5 + $0x50] sm:$0xff]
        %v335 = vld [vmem:[#allocation5 + $0x58] sm:$0xff]
        %v336 = vld [vmem:[#allocation5 + $0x60] sm:$0xff]
        %v337 = vld [vmem:[#allocation5 + $0x68] sm:$0xff]
        %v338 = vld [vmem:[#allocation5 + $0x70] sm:$0xff]
        %v339 = vld [vmem:[#allocation5 + $0x78] sm:$0xff]
        %v340 = vld [vmem:[#allocation7] sm:$0x3]
        %v341 = vld [vmem:[%s276] sm:$0xff]
        %v342 = vld [vmem:[%s276 + $0x8] sm:$0xff]
        %v343 = vld [vmem:[%s276 + $0x10] sm:$0xff]
        %v344 = vld [vmem:[%s276 + $0x18] sm:$0xff]
        %v345 = vld [vmem:[%s276 + $0x20] sm:$0xff]
        %v346 = vld [vmem:[%s276 + $0x28] sm:$0xff]
        %v347 = vunpack.c.l.bf16 %v341
        %v348 = vunpack.c.h.bf16 %v341
        %v349 = vunpack.c.l.bf16 %v342
        %v350 = vunpack.c.h.bf16 %v342
        %v351 = vunpack.c.l.bf16 %v343
        %v352 = vunpack.c.h.bf16 %v343
        %v353 = vunpack.c.l.bf16 %v344
        %v354 = vunpack.c.h.bf16 %v344
        %v355 = vunpack.c.l.bf16 %v345
        %v356 = vunpack.c.h.bf16 %v345
        %v357 = vunpack.c.l.bf16 %v346
        %v358 = vunpack.c.h.bf16 %v346
        %v360 = vperm.slane %v340, 0
        %v361 = vperm.slane %v340, 1
        %v370 = vunpack.c.l.b16 %v318
        %v371 = vunpack.c.l.b16 %v319
        %v372 = vunpack.c.l.b16 %v320
        %v373 = vunpack.c.l.b16 %v321
        %v374 = vunpack.c.l.b16 %v322
        %v375 = vunpack.c.l.b16 %v323
        %v376 = vpack.c.b16 %v371, %v370
        %v377 = vpack.c.b16 %v373, %v372
        %v378 = vpack.c.b16 %v375, %v374
        %v398 = vunpack.c.l.b16 %v324
        %v399 = vunpack.c.h.b16 %v324
        %v400 = vunpack.c.l.b16 %v325
        %v401 = vunpack.c.h.b16 %v325
        %v402 = vunpack.c.l.b16 %v326
        %v403 = vunpack.c.h.b16 %v326
        %v404 = vunpack.c.l.b16 %v327
        %v405 = vunpack.c.h.b16 %v327
        %v406 = vunpack.c.l.b16 %v328
        %v407 = vunpack.c.h.b16 %v328
        %v408 = vunpack.c.l.b16 %v329
        %v409 = vunpack.c.h.b16 %v329
        %v410 = vunpack.c.l.b16 %v330
        %v411 = vunpack.c.h.b16 %v330
        %v412 = vunpack.c.l.b16 %v331
        %v413 = vunpack.c.h.b16 %v331
        %v414 = vunpack.c.l.b16 %v332
        %v415 = vunpack.c.h.b16 %v332
        %v416 = vunpack.c.l.b16 %v333
        %v417 = vunpack.c.h.b16 %v333
        %v418 = vunpack.c.l.b16 %v334
        %v419 = vunpack.c.h.b16 %v334
        %v420 = vunpack.c.l.b16 %v335
        %v421 = vunpack.c.h.b16 %v335
        %v422 = vunpack.c.l.b16 %v336
        %v423 = vunpack.c.h.b16 %v336
        %v424 = vunpack.c.l.b16 %v337
        %v425 = vunpack.c.h.b16 %v337
        %v426 = vunpack.c.l.b16 %v338
        %v427 = vunpack.c.h.b16 %v338
        %v428 = vunpack.c.l.b16 %v339
        %v429 = vunpack.c.h.b16 %v339
        %v430 = vpack.c.b16 %v400, %v398
        %v431 = vpack.c.b16 %v401, %v399
        %v432 = vpack.c.b16 %v404, %v402
        %v433 = vpack.c.b16 %v405, %v403
        %v434 = vpack.c.b16 %v408, %v406
        %v435 = vpack.c.b16 %v409, %v407
        %v436 = vpack.c.b16 %v412, %v410
        %v437 = vpack.c.b16 %v413, %v411
        %v438 = vpack.c.b16 %v416, %v414
        %v439 = vpack.c.b16 %v417, %v415
        %v440 = vpack.c.b16 %v420, %v418
        %v441 = vpack.c.b16 %v421, %v419
        %v442 = vpack.c.b16 %v424, %v422
        %v443 = vpack.c.b16 %v425, %v423
        %v444 = vpack.c.b16 %v428, %v426
        %v445 = vpack.c.b16 %v429, %v427
        %462 = vmatpush.bf16.msra.mxu0 %v444
        %463 = vmatpush.bf16.msra.mxu0 %v442
        %464 = vmatpush.bf16.msra.mxu0 %v440
        %465 = vmatpush.bf16.msra.mxu0 %v438
        %466 = vmatpush.bf16.msra.mxu0 %v436
        %467 = vmatpush.bf16.msra.mxu0 %v434
        %468 = vmatpush.bf16.msra.mxu0 %v432
        %469 = vmatpush.bf16.msra.mxu0 %v430
        %470 = vmatmul.bf16.gmra.mxu0 %v376
        %v471 = vpop.f32.mrf.mxu0
        %v472 = vadd.f32 %v360, %v471
        %v473 = vpop.f32.mrf.mxu0
        %v474 = vadd.f32 %v360, %v473
        %475 = vmatmul.bf16.gmra.mxu0 %v377
        %v476 = vpop.f32.mrf.mxu0
        %v477 = vadd.f32 %v360, %v476
        %v478 = vpop.f32.mrf.mxu0
        %v479 = vadd.f32 %v360, %v478
        %480 = vmatmul.bf16.gmra.mxu0 %v378
        %v481 = vpop.f32.mrf.mxu0
        %v482 = vadd.f32 %v360, %v481
        %v483 = vpop.f32.mrf.mxu0
        %v484 = vadd.f32 %v360, %v483
        %485 = vdwg.mxu0
        %486 = vmatpush.bf16.msra.mxu0 %v445
        %487 = vmatpush.bf16.msra.mxu0 %v443
        %488 = vmatpush.bf16.msra.mxu0 %v441
        %489 = vmatpush.bf16.msra.mxu0 %v439
        %490 = vmatpush.bf16.msra.mxu0 %v437
        %491 = vmatpush.bf16.msra.mxu0 %v435
        %492 = vmatpush.bf16.msra.mxu0 %v433
        %493 = vmatpush.bf16.msra.mxu0 %v431
        %494 = vmatmul.bf16.gmra.mxu0 %v376
        %v495 = vpop.f32.mrf.mxu0
        %v496 = vadd.f32 %v361, %v495
        %v497 = vpop.f32.mrf.mxu0
        %v498 = vadd.f32 %v361, %v497
        %499 = vmatmul.bf16.gmra.mxu0 %v377
        %v500 = vpop.f32.mrf.mxu0
        %v501 = vadd.f32 %v361, %v500
        %v502 = vpop.f32.mrf.mxu0
        %v503 = vadd.f32 %v361, %v502
        %504 = vmatmul.bf16.gmra.mxu0 %v378
        %v505 = vpop.f32.mrf.mxu0
        %v506 = vadd.f32 %v361, %v505
        %v507 = vpop.f32.mrf.mxu0
        %v508 = vadd.f32 %v361, %v507
        %509 = vdwg.mxu0
        %v510 = vadd.f32 %v347, %v348
        %511 = vadd.xlane.f32.xlu0 %v510
        %v512 = vpop.xlane.xlu0 %511
        %v513 = vadd.f32 %v349, %v350
        %514 = vadd.xlane.f32.xlu0 %v513
        %v515 = vpop.xlane.xlu0 %514
        %v516 = vadd.f32 %v351, %v352
        %517 = vadd.xlane.f32.xlu0 %v516
        %v518 = vpop.xlane.xlu0 %517
        %v519 = vadd.f32 %v353, %v354
        %520 = vadd.xlane.f32.xlu0 %v519
        %v521 = vpop.xlane.xlu0 %520
        %v522 = vadd.f32 %v355, %v356
        %523 = vadd.xlane.f32.xlu0 %v522
        %v524 = vpop.xlane.xlu0 %523
        %v525 = vadd.f32 %v357, %v358
        %526 = vadd.xlane.f32.xlu0 %v525
        %v527 = vpop.xlane.xlu0 %526
        %v528 = vrcp.pop 256.0
        %v529 = vmul.f32 256.0, %v528
        %v530 = vsub.f32 1.0, %v529
        %v531 = vmul.f32 %v528, %v530
        %v532 = vadd.f32 %v528, %v531
        %vm533 = vweird.f32 %v528
        %v534 = vsel %vm533, %v528, %v532
        %v535 = vmul.f32 %v512, %v534
        %v536 = vmul.f32 %v515, %v534
        %v537 = vmul.f32 %v518, %v534
        %v538 = vmul.f32 %v521, %v534
        %v539 = vmul.f32 %v524, %v534
        %v540 = vmul.f32 %v527, %v534
        %v541 = vsub.f32 %v347, %v535
        %v542 = vsub.f32 %v348, %v535
        %v543 = vsub.f32 %v349, %v536
        %v544 = vsub.f32 %v350, %v536
        %v545 = vsub.f32 %v351, %v537
        %v546 = vsub.f32 %v352, %v537
        %v547 = vsub.f32 %v353, %v538
        %v548 = vsub.f32 %v354, %v538
        %v549 = vsub.f32 %v355, %v539
        %v550 = vsub.f32 %v356, %v539
        %v551 = vsub.f32 %v357, %v540
        %v552 = vsub.f32 %v358, %v540
        %v553 = vmul.f32 %v541, %v541
        %v554 = vmul.f32 %v542, %v542
        %v555 = vmul.f32 %v543, %v543
        %v556 = vmul.f32 %v544, %v544
        %v557 = vmul.f32 %v545, %v545
        %v558 = vmul.f32 %v546, %v546
        %v559 = vmul.f32 %v547, %v547
        %v560 = vmul.f32 %v548, %v548
        %v561 = vmul.f32 %v549, %v549
        %v562 = vmul.f32 %v550, %v550
        %v563 = vmul.f32 %v551, %v551
        %v564 = vmul.f32 %v552, %v552
        %v565 = vadd.f32 %v553, %v554
        %566 = vadd.xlane.f32.xlu0 %v565
        %v567 = vpop.xlane.xlu0 %566
        %v568 = vadd.f32 %v555, %v556
        %569 = vadd.xlane.f32.xlu0 %v568
        %v570 = vpop.xlane.xlu0 %569
        %v571 = vadd.f32 %v557, %v558
        %572 = vadd.xlane.f32.xlu0 %v571
        %v573 = vpop.xlane.xlu0 %572
        %v574 = vadd.f32 %v559, %v560
        %575 = vadd.xlane.f32.xlu0 %v574
        %v576 = vpop.xlane.xlu0 %575
        %v577 = vadd.f32 %v561, %v562
        %578 = vadd.xlane.f32.xlu0 %v577
        %v579 = vpop.xlane.xlu0 %578
        %v580 = vadd.f32 %v563, %v564
        %581 = vadd.xlane.f32.xlu0 %v580
        %v582 = vpop.xlane.xlu0 %581
        %v583 = vmul.f32 %v567, %v534
        %v584 = vmul.f32 %v570, %v534
        %v585 = vmul.f32 %v573, %v534
        %v586 = vmul.f32 %v576, %v534
        %v587 = vmul.f32 %v579, %v534
        %v588 = vmul.f32 %v582, %v534
        %v589 = vadd.f32 %v583, 1e-05
        %v590 = vadd.f32 %v584, 1e-05
        %v591 = vadd.f32 %v585, 1e-05
        %v592 = vadd.f32 %v586, 1e-05
        %v593 = vadd.f32 %v587, 1e-05
        %v594 = vadd.f32 %v588, 1e-05
        %v595 = vrsqrt.pop %v589
        %v596 = vmul.f32 %v595, %v589
        %v597 = vmul.f32 %v596, %v595
        %v598 = vmul.f32 0.5, %v597
        %v599 = vsub.f32 1.5, %v598
        %v600 = vmul.f32 %v595, %v599
        %vm601 = vweird.f32 %v589
        %vm602 = vweird.f32 %v595
        %vm603 = vmor %vm601, %vm602
        %v604 = vsel %vm603, %v595, %v600
        %v605 = vrsqrt.pop %v590
        %v606 = vmul.f32 %v605, %v590
        %v607 = vmul.f32 %v606, %v605
        %v608 = vmul.f32 0.5, %v607
        %v609 = vsub.f32 1.5, %v608
        %v610 = vmul.f32 %v605, %v609
        %vm611 = vweird.f32 %v590
        %vm612 = vweird.f32 %v605
        %vm613 = vmor %vm611, %vm612
        %v614 = vsel %vm613, %v605, %v610
        %v615 = vrsqrt.pop %v591
        %v616 = vmul.f32 %v615, %v591
        %v617 = vmul.f32 %v616, %v615
        %v618 = vmul.f32 0.5, %v617
        %v619 = vsub.f32 1.5, %v618
        %v620 = vmul.f32 %v615, %v619
        %vm621 = vweird.f32 %v591
        %vm622 = vweird.f32 %v615
        %vm623 = vmor %vm621, %vm622
        %v624 = vsel %vm623, %v615, %v620
        %v625 = vrsqrt.pop %v592
        %v626 = vmul.f32 %v625, %v592
        %v627 = vmul.f32 %v626, %v625
        %v628 = vmul.f32 0.5, %v627
        %v629 = vsub.f32 1.5, %v628
        %v630 = vmul.f32 %v625, %v629
        %vm631 = vweird.f32 %v592
        %vm632 = vweird.f32 %v625
        %vm633 = vmor %vm631, %vm632
        %v634 = vsel %vm633, %v625, %v630
        %v635 = vrsqrt.pop %v593
        %v636 = vmul.f32 %v635, %v593
        %v637 = vmul.f32 %v636, %v635
        %v638 = vmul.f32 0.5, %v637
        %v639 = vsub.f32 1.5, %v638
        %v640 = vmul.f32 %v635, %v639
        %vm641 = vweird.f32 %v593
        %vm642 = vweird.f32 %v635
        %vm643 = vmor %vm641, %vm642
        %v644 = vsel %vm643, %v635, %v640
        %v645 = vrsqrt.pop %v594
        %v646 = vmul.f32 %v645, %v594
        %v647 = vmul.f32 %v646, %v645
        %v648 = vmul.f32 0.5, %v647
        %v649 = vsub.f32 1.5, %v648
        %v650 = vmul.f32 %v645, %v649
        %vm651 = vweird.f32 %v594
        %vm652 = vweird.f32 %v645
        %vm653 = vmor %vm651, %vm652
        %v654 = vsel %vm653, %v645, %v650
        %v655 = vmul.f32 %v541, %v604
        %v656 = vmul.f32 %v542, %v604
        %v657 = vmul.f32 %v543, %v614
        %v658 = vmul.f32 %v544, %v614
        %v659 = vmul.f32 %v545, %v624
        %v660 = vmul.f32 %v546, %v624
        %v661 = vmul.f32 %v547, %v634
        %v662 = vmul.f32 %v548, %v634
        %v663 = vmul.f32 %v549, %v644
        %v664 = vmul.f32 %v550, %v644
        %v665 = vmul.f32 %v551, %v654
        %v666 = vmul.f32 %v552, %v654
        %v667 = vsub.f32 %v472, %v655
        %v668 = vsub.f32 %v496, %v656
        %v669 = vsub.f32 %v474, %v657
        %v670 = vsub.f32 %v498, %v658
        %v671 = vsub.f32 %v477, %v659
        %v672 = vsub.f32 %v501, %v660
        %v673 = vsub.f32 %v479, %v661
        %v674 = vsub.f32 %v503, %v662
        %v675 = vsub.f32 %v482, %v663
        %v676 = vsub.f32 %v506, %v664
        %v677 = vsub.f32 %v484, %v665
        %v678 = vsub.f32 %v508, %v666
        %v679 = vand.u32 2147483647, %v667
        %v680 = vand.u32 2147483647, %v668
        %v681 = vand.u32 2147483647, %v669
        %v682 = vand.u32 2147483647, %v670
        %v683 = vand.u32 2147483647, %v671
        %v684 = vand.u32 2147483647, %v672
        %v685 = vand.u32 2147483647, %v673
        %v686 = vand.u32 2147483647, %v674
        %v687 = vand.u32 2147483647, %v675
        %v688 = vand.u32 2147483647, %v676
        %v689 = vand.u32 2147483647, %v677
        %v690 = vand.u32 2147483647, %v678
        %vm691 = vcmp.lt.f32.partialorder %v679, 2.0
        %vm692 = vcmp.lt.f32.partialorder %v680, 2.0
        %vm693 = vcmp.lt.f32.partialorder %v681, 2.0
        %vm694 = vcmp.lt.f32.partialorder %v682, 2.0
        %vm695 = vcmp.lt.f32.partialorder %v683, 2.0
        %vm696 = vcmp.lt.f32.partialorder %v684, 2.0
        %vm697 = vcmp.lt.f32.partialorder %v685, 2.0
        %vm698 = vcmp.lt.f32.partialorder %v686, 2.0
        %vm699 = vcmp.lt.f32.partialorder %v687, 2.0
        %vm700 = vcmp.lt.f32.partialorder %v688, 2.0
        %vm701 = vcmp.lt.f32.partialorder %v689, 2.0
        %vm702 = vcmp.lt.f32.partialorder %v690, 2.0
        %v703 = vmul.f32 %v667, 0.25
        %v704 = vmul.f32 %v668, 0.25
        %v705 = vmul.f32 %v669, 0.25
        %v706 = vmul.f32 %v670, 0.25
        %v707 = vmul.f32 %v671, 0.25
        %v708 = vmul.f32 %v672, 0.25
        %v709 = vmul.f32 %v673, 0.25
        %v710 = vmul.f32 %v674, 0.25
        %v711 = vmul.f32 %v675, 0.25
        %v712 = vmul.f32 %v676, 0.25
        %v713 = vmul.f32 %v677, 0.25
        %v714 = vmul.f32 %v678, 0.25
        %v715 = vmul.f32 %v703, %v667
        %v716 = vmul.f32 %v704, %v668
        %v717 = vmul.f32 %v705, %v669
        %v718 = vmul.f32 %v706, %v670
        %v719 = vmul.f32 %v707, %v671
        %v720 = vmul.f32 %v708, %v672
        %v721 = vmul.f32 %v709, %v673
        %v722 = vmul.f32 %v710, %v674
        %v723 = vmul.f32 %v711, %v675
        %v724 = vmul.f32 %v712, %v676
        %v725 = vmul.f32 %v713, %v677
        %v726 = vmul.f32 %v714, %v678
        %v727 = vsub.f32 %v679, 1.0
        %v728 = vsub.f32 %v680, 1.0
        %v729 = vsub.f32 %v681, 1.0
        %v730 = vsub.f32 %v682, 1.0
        %v731 = vsub.f32 %v683, 1.0
        %v732 = vsub.f32 %v684, 1.0
        %v733 = vsub.f32 %v685, 1.0
        %v734 = vsub.f32 %v686, 1.0
        %v735 = vsub.f32 %v687, 1.0
        %v736 = vsub.f32 %v688, 1.0
        %v737 = vsub.f32 %v689, 1.0
        %v738 = vsub.f32 %v690, 1.0
        %v739 = vsel %vm691, %v715, %v727
        %v740 = vsel %vm692, %v716, %v728
        %v741 = vsel %vm693, %v717, %v729
        %v742 = vsel %vm694, %v718, %v730
        %v743 = vsel %vm695, %v719, %v731
        %v744 = vsel %vm696, %v720, %v732
        %v745 = vsel %vm697, %v721, %v733
        %v746 = vsel %vm698, %v722, %v734
        %v747 = vsel %vm699, %v723, %v735
        %v748 = vsel %vm700, %v724, %v736
        %v749 = vsel %vm701, %v725, %v737
        %v750 = vsel %vm702, %v726, %v738
        %p751 = scmp.ne.s32.totalorder %s25, 2
        // Predicated region
        $region53: #{tpu_custom_call.1} parent=35 // pred_check
          %p752 = pneg %p751
        $region54: #{tpu_custom_call.1} parent=35 // pred_check_branch
          %754 = sbr.rel (%p752) target = $region56
        $region55: #{tpu_custom_call.1} parent=35 // pred_region
          %v755 = vadd.f32 %v739, %v740
          %v756 = vadd.f32 %v755, %v741
          %v757 = vadd.f32 %v756, %v742
          %v758 = vadd.f32 %v757, %v743
          %v759 = vadd.f32 %v758, %v744
          %v760 = vadd.f32 %v759, %v745
          %v761 = vadd.f32 %v760, %v746
          %v762 = vadd.f32 %v761, %v747
          %v763 = vadd.f32 %v762, %v748
          %v764 = vadd.f32 %v763, %v749
          %v765 = vadd.f32 %v764, %v750
          %766 = vadd.xlane.f32.xlu0 %v765
          %v767 = vpop.xlane.xlu0 %766
          %v768 = vrot.slane %v767, 4
          %v769 = vadd.f32 %v767, %v768
          %v770 = vrot.slane %v769, 2
          %v771 = vadd.f32 %v769, %v770
          %v772 = vrot.slane %v771, 1
          %v773 = vadd.f32 %v771, %v772
          %s774 = vtos %v773
          %v775 = vstv %s774
          %776 = vst [vmem:[%s306] sm:$0xff] %v775
        $region56: #{tpu_custom_call.1} parent=35 // pred_fallthru
          _
        %p777 = scmp.eq.s32.totalorder %s25, 2
        // Predicated region
        $region57: #{tpu_custom_call.1} parent=35 // pred_check
          %p778 = pneg %p777
        $region58: #{tpu_custom_call.1} parent=35 // pred_check_branch
          %780 = sbr.rel (%p778) target = $region60
        $region59: #{tpu_custom_call.1} parent=35 // pred_region
          %s781 = smul.u32 %s25, 48
          %v782 = vlaneseq
          %v783 = vshrl.u32 %v782, 7
          %v784 = vadd.s32 %v783, 8
          %v785 = vadd.s32 %v783, 16
          %v786 = vadd.s32 %v783, 24
          %v787 = vadd.s32 %v783, 32
          %v788 = vadd.s32 %v783, 40
          %v789 = vstv %s781
          %v790 = vadd.s32 %v789, %v783
          %v791 = vadd.s32 %v789, %v784
          %v792 = vadd.s32 %v789, %v785
          %v793 = vadd.s32 %v789, %v786
          %v794 = vadd.s32 %v789, %v787
          %v795 = vadd.s32 %v789, %v788
          %vm796 = vcmp.lt.s32.totalorder %v790, 128
          %vm797 = vcmp.lt.s32.totalorder %v791, 128
          %vm798 = vcmp.lt.s32.totalorder %v792, 128
          %vm799 = vcmp.lt.s32.totalorder %v793, 128
          %vm800 = vcmp.lt.s32.totalorder %v794, 128
          %vm801 = vcmp.lt.s32.totalorder %v795, 128
          %v802 = vsel %vm796, %v739, 0.0
          %v803 = vsel %vm796, %v740, 0.0
          %v804 = vsel %vm797, %v741, 0.0
          %v805 = vsel %vm797, %v742, 0.0
          %v806 = vsel %vm798, %v743, 0.0
          %v807 = vsel %vm798, %v744, 0.0
          %v808 = vsel %vm799, %v745, 0.0
          %v809 = vsel %vm799, %v746, 0.0
          %v810 = vsel %vm800, %v747, 0.0
          %v811 = vsel %vm800, %v748, 0.0
          %v812 = vsel %vm801, %v749, 0.0
          %v813 = vsel %vm801, %v750, 0.0
          %v814 = vadd.f32 %v802, %v803
          %v815 = vadd.f32 %v814, %v804
          %v816 = vadd.f32 %v815, %v805
          %v817 = vadd.f32 %v816, %v806
          %v818 = vadd.f32 %v817, %v807
          %v819 = vadd.f32 %v818, %v808
          %v820 = vadd.f32 %v819, %v809
          %v821 = vadd.f32 %v820, %v810
          %v822 = vadd.f32 %v821, %v811
          %v823 = vadd.f32 %v822, %v812
          %v824 = vadd.f32 %v823, %v813
          %825 = vadd.xlane.f32.xlu0 %v824
          %v826 = vpop.xlane.xlu0 %825
          %v827 = vrot.slane %v826, 4
          %v828 = vadd.f32 %v826, %v827
          %v829 = vrot.slane %v828, 2
          %v830 = vadd.f32 %v828, %v829
          %v831 = vrot.slane %v830, 1
          %v832 = vadd.f32 %v830, %v831
          %s833 = vtos %v832
          %v834 = vstv %s833
          %835 = vst [vmem:[%s306] sm:$0xff] %v834
        $region60: #{tpu_custom_call.1} parent=35 // pred_fallthru
          _
        %s836 = sand.u32 %s127, 1
        %s837 = scalar_lea.sflag [#allocation4], %s836
        %s838 = sand.u32 %s127, 1
        %s839 = smul.addr %s838, 8
        %s840 = scalar_lea.vmem [#allocation10], %s839
        // Predicated region
        $region61: #{tpu_custom_call.1} parent=35 // pred_check
          %p841 = pneg %p137
        $region62: #{tpu_custom_call.1} parent=35 // pred_check_branch
          %843 = sbr.rel (%p841) target = $region64
        $region63: #{tpu_custom_call.1} parent=35 // pred_region
          %845 = vsyncadd %s837, 0
          %s846 = smul.addr %s25, 8
          %s847 = scalar_lea.hbm %s4, %s846
          %s849 = sshll.u32 %s840, 4
          %s850 = int_to_ptr.vmem [resolvable:$true] %s849
          %s851 = sshll.u32 %s847, 4
          %s852 = int_to_ptr.hbm [resolvable:$true] %s851
          %854 = dma.vmem_to_hbm [thread:$0]  %s850, 128, %s852, %s837
        $region64: #{tpu_custom_call.1} parent=35 // pred_fallthru
          _
      $region36: #{tpu_custom_call.1} parent=5 // pred_fallthru
        _
      %p855 = scmp.le.s32.totalorder 2, %s20
      // Predicated region
      $region65: #{tpu_custom_call.1} parent=5 // pred_check
        %p856 = pneg %p855
      $region66: #{tpu_custom_call.1} parent=5 // pred_check_branch
        %858 = sbr.rel (%p856) target = $region68
      $region67: #{tpu_custom_call.1} parent=5 // pred_region
        %s859 = ssub.s32 %s20, 2
        // Predicated region
        $region69: #{tpu_custom_call.1} parent=67 // pred_check
          %p860 = pneg %p143
        $region70: #{tpu_custom_call.1} parent=67 // pred_check_branch
          %862 = sbr.rel (%p860) target = $region72
        $region71: #{tpu_custom_call.1} parent=67 // pred_region
          %s863 = sand.u32 %s128, 1
          %s864 = scalar_lea.sflag [#allocation4], %s863
          %s865 = sand.u32 %s128, 1
          %s866 = smul.addr %s865, 8
          %s867 = scalar_lea.vmem [#allocation10], %s866
          %869 = dma.done %s864, 128
        $region72: #{tpu_custom_call.1} parent=67 // pred_fallthru
          _
      $region68: #{tpu_custom_call.1} parent=5 // pred_fallthru
        _
    $region6: #{tpu_custom_call.1} parent=1 // loop_footer
      %s24 = sadd.s32 1, %s20
    $region7: #{tpu_custom_call.1} parent=1 // loop_footer_branch
      %19 = sbr.rel target = $region3
    $region8: #{tpu_custom_call.1} parent=1 // loop_exit
      _
    %870 = vsyncpa [#allocation3], 1
    %s871 = scalar_lea.sflag [#allocation3], 1
    %872 = vsyncpa %s871, 1
    %873 = vsyncpa [#allocation6], 1
    %874 = vsyncpa [#allocation9], 1
    %s875 = scalar_lea.sflag [#allocation9], 1
    %876 = vsyncpa %s875, 1
    %877 = vsyncpa [#allocation4], 1
    %s878 = scalar_lea.sflag [#allocation4], 1
    %879 = vsyncpa %s878, 1

</llo_original>
